<compile_context>
chip_gen: v6e
topology: v6e:2x2x1
jax: 0.10.0
libtpu: 0.0.40
codegen_flags: <defaults>
</compile_context>

<pallas_src>
import functools

import jax
import jax.numpy as jnp
from jax.experimental import pallas as pl
from jax.experimental.pallas import tpu as pltpu

LANE = 128
SUBLANE = 8


def _round_up(x, m):
    return (x + m - 1) // m * m


# ---------------------------------------------------------------------------
# Kernel 1: feature transform  h = x @ W   (rows tiled over the grid)
# ---------------------------------------------------------------------------
def _transform_kernel(x_ref, w_ref, o_ref):
    o_ref[...] = jnp.dot(
        x_ref[...], w_ref[...], preferred_element_type=jnp.float32
    ).astype(o_ref.dtype)


def _transform(x, w, *, tile_n):
    n, d_in = x.shape
    d_out = w.shape[1]
    cost = pl.CostEstimate(
        flops=2 * n * d_in * d_out,
        transcendentals=0,
        bytes_accessed=4 * (n * d_in + d_in * d_out + n * d_out),
    )
    return pl.pallas_call(
        _transform_kernel,
        out_shape=jax.ShapeDtypeStruct((n, d_out), jnp.float32),
        grid_spec=pl.GridSpec(
            grid=(n // tile_n,),
            in_specs=[
                pl.BlockSpec((tile_n, d_in), lambda i: (i, 0)),
                pl.BlockSpec((d_in, d_out), lambda i: (0, 0)),  # W resident
            ],
            out_specs=pl.BlockSpec((tile_n, d_out), lambda i: (i, 0)),
        ),
        compiler_params=pltpu.CompilerParams(dimension_semantics=("parallel",)),
        cost_estimate=cost,
    )(x, w)


# ---------------------------------------------------------------------------
# Kernel 2: attention scores + masked softmax + neighbour aggregation (+ReLU)
# ---------------------------------------------------------------------------
def _gat_attn_kernel(h_tile_ref, h_all_ref, adj_ref, asrc_ref, adst_ref,
                     bias_ref, o_ref, *, apply_relu):
    h_i = h_tile_ref[...]          # (T, D)   target-node features of this tile
    h_all = h_all_ref[...]         # (Np, D)  all (padded) source-node features

    # Per-target score s_dst[i] = <h_i, att_dst>                  -> (T, 1)
    s_dst = jnp.sum(h_i * adst_ref[...], axis=-1, keepdims=True)
    # Per-source score row s_src[j] = <h_j, att_src> via the MXU   -> (1, Np)
    s_src = jax.lax.dot_general(
        asrc_ref[...], h_all,
        dimension_numbers=(((1,), (1,)), ((), ())),
        preferred_element_type=jnp.float32,
    )

    e = s_dst + s_src                            # (T, Np)
    e = jnp.where(e > 0, e, 0.2 * e)             # LeakyReLU(negative_slope=0.2)

    mask = adj_ref[...] > 0.0
    e = jnp.where(mask, e, -1e30)

    # Masked softmax over source nodes (every row has a self loop -> denom > 0).
    e_max = jnp.max(e, axis=-1, keepdims=True)
    p = jnp.where(mask, jnp.exp(e - e_max), 0.0)
    denom = jnp.sum(p, axis=-1, keepdims=True)
    attn = p / denom

    out = jnp.dot(attn, h_all, preferred_element_type=jnp.float32) + bias_ref[...]
    if apply_relu:
        out = jnp.maximum(out, 0.0)
    o_ref[...] = out.astype(o_ref.dtype)


def _attention_aggregate(h, adj, att_src, att_dst, bias, *, tile_n, apply_relu):
    n, d = h.shape
    cost = pl.CostEstimate(
        flops=2 * n * n * d + 4 * n * d + 8 * n * n,
        transcendentals=n * n,
        bytes_accessed=4 * (3 * n * d + n * n + 3 * d),
    )
    kernel = functools.partial(_gat_attn_kernel, apply_relu=apply_relu)
    return pl.pallas_call(
        kernel,
        out_shape=jax.ShapeDtypeStruct((n, d), jnp.float32),
        grid_spec=pl.GridSpec(
            grid=(n // tile_n,),
            in_specs=[
                pl.BlockSpec((tile_n, d), lambda i: (i, 0)),  # h rows of tile
                pl.BlockSpec((n, d), lambda i: (0, 0)),       # h resident (sources)
                pl.BlockSpec((tile_n, n), lambda i: (i, 0)),  # adjacency rows
                pl.BlockSpec((1, d), lambda i: (0, 0)),       # att_src resident
                pl.BlockSpec((1, d), lambda i: (0, 0)),       # att_dst resident
                pl.BlockSpec((1, d), lambda i: (0, 0)),       # bias resident
            ],
            out_specs=pl.BlockSpec((tile_n, d), lambda i: (i, 0)),
        ),
        compiler_params=pltpu.CompilerParams(dimension_semantics=("parallel",)),
        cost_estimate=cost,
    )(h, h, adj, att_src, att_dst, bias)


# ---------------------------------------------------------------------------
# Full GAT forward (stack of GATConv + ReLU, final GATConv without ReLU)
# ---------------------------------------------------------------------------
def gat_forward(x, edge_index, edge_weight, params, *, tile_n=256):
    """Dense-adjacency GAT forward pass (eval mode).

    x:           (N, input_size) float32 node features
    edge_index:  (2, E) int32, PyG convention (row 0 = source, row 1 = target)
    edge_weight: accepted for signature parity; GATConv(x, edge_index) ignores it
    params:      list of dicts per GATConv layer with
                 'w' (d_in, d_out), 'att_src' (d_out,), 'att_dst' (d_out,),
                 'bias' (d_out,).  Last entry is the final layer (no ReLU).
    """
    del edge_weight  # unused by GATConv in the reference module
    n = x.shape[0]

    # Dense adjacency: adj[i, j] = 1 iff edge j -> i exists; add self loops.
    adj = jnp.zeros((n, n), jnp.float32)
    adj = adj.at[edge_index[1], edge_index[0]].set(1.0)
    adj = jnp.maximum(adj, jnp.eye(n, dtype=jnp.float32))

    # Pad node dim to a multiple of the row tile; padded rows keep a self loop
    # so the masked softmax denominator stays > 0.  They are sliced off at the end.
    tile_n = _round_up(min(tile_n, n), SUBLANE)
    n_pad = _round_up(n, tile_n)
    adj_p = jnp.zeros((n_pad, n_pad), jnp.float32).at[:n, :n].set(adj)
    adj_p = jnp.maximum(adj_p, jnp.eye(n_pad, dtype=jnp.float32))

    d_in = x.shape[1]
    d_in_p = _round_up(d_in, LANE)
    h = jnp.zeros((n_pad, d_in_p), jnp.float32).at[:n, :d_in].set(x)

    num_layers = len(params)
    for li, p in enumerate(params):
        w, a_s, a_d, b = p["w"], p["att_src"], p["att_dst"], p["bias"]
        di, do = w.shape
        di_p, do_p = _round_up(di, LANE), _round_up(do, LANE)
        # Zero-padding to 128-lane-dense feature dims is exact.
        w_p = jnp.zeros((di_p, do_p), jnp.float32).at[:di, :do].set(w)
        a_s_p = jnp.zeros((1, do_p), jnp.float32).at[0, :do].set(a_s)
        a_d_p = jnp.zeros((1, do_p), jnp.float32).at[0, :do].set(a_d)
        b_p = jnp.zeros((1, do_p), jnp.float32).at[0, :do].set(b)

        hp = _transform(h, w_p, tile_n=tile_n)
        h = _attention_aggregate(
            hp, adj_p, a_s_p, a_d_p, b_p,
            tile_n=tile_n, apply_relu=(li < num_layers - 1),
        )
        # TODO(synk): training-mode dropout (F.dropout) intentionally omitted —
        # this is an eval-mode forward; use pltpu.prng_seed/prng_random_bits if needed.

    d_out = params[-1]["w"].shape[1]
    return h[:n, :d_out]


# ---------------------------------------------------------------------------
# Pure-JAX reference (same dense-adjacency math) for correctness checking
# ---------------------------------------------------------------------------
def gat_reference(x, edge_index, params):
    n = x.shape[0]
    adj = jnp.zeros((n, n), jnp.float32)
    adj = adj.at[edge_index[1], edge_index[0]].set(1.0)
    adj = jnp.maximum(adj, jnp.eye(n, dtype=jnp.float32))
    num_layers = len(params)
    h = x
    for li, p in enumerate(params):
        hp = h @ p["w"]
        s_src = hp @ p["att_src"]
        s_dst = hp @ p["att_dst"]
        e = s_dst[:, None] + s_src[None, :]
        e = jnp.where(e > 0, e, 0.2 * e)
        e = jnp.where(adj > 0, e, -jnp.inf)
        attn = jax.nn.softmax(e, axis=-1)
        h = attn @ hp + p["bias"]
        if li < num_layers - 1:
            h = jax.nn.relu(h)
    return h


if __name__ == "__main__":
    # Small shapes consistent with the module: N nodes, E directed edges,
    # input_size -> hidden (x num_layers) -> output_size.
    N, E = 96, 384
    INPUT_SIZE, HIDDEN, OUTPUT_SIZE, NUM_LAYERS = 32, 64, 16, 2
    TILE_N = 32  # demo tile; sweep 512-2048 at realistic graph sizes

    key = jax.random.PRNGKey(0)
    kx, ke, kp = jax.random.split(key, 3)

    x = jax.random.normal(kx, (N, INPUT_SIZE), jnp.float32)
    edge_index = jax.random.randint(ke, (2, E), 0, N, dtype=jnp.int32)
    edge_weight = jnp.ones((E,), jnp.float32)  # unused by GATConv in the module

    dims = ([(INPUT_SIZE, HIDDEN)]
            + [(HIDDEN, HIDDEN)] * (NUM_LAYERS - 1)
            + [(HIDDEN, OUTPUT_SIZE)])
    params = []
    for di, do in dims:
        kp, k1, k2, k3, k4 = jax.random.split(kp, 5)
        s = 1.0 / jnp.sqrt(jnp.float32(di))
        params.append(dict(
            w=jax.random.uniform(k1, (di, do), jnp.float32, -s, s),
            att_src=jax.random.uniform(k2, (do,), jnp.float32, -s, s),
            att_dst=jax.random.uniform(k3, (do,), jnp.float32, -s, s),
            bias=jax.random.uniform(k4, (do,), jnp.float32, -s, s),
        ))

    fwd = jax.jit(functools.partial(gat_forward, tile_n=TILE_N))
    y = fwd(x, edge_index, edge_weight, params)
    jax.block_until_ready(y)

    y_ref = gat_reference(x, edge_index, params)
    assert y.shape == (N, OUTPUT_SIZE)
    err = float(jnp.max(jnp.abs(y - y_ref)))
    assert jnp.allclose(y, y_ref, atol=2e-4, rtol=2e-4), f"max abs err {err}"

    print("KERNEL_OK")
</pallas_src>

<mosaic_0001>
module attributes {stable_mosaic.version = 11 : i64} {
  func.func @_transform_kernel(%arg0: i32, %arg1: memref<32x128xf32, #tpu.memory_space<vmem>>, %arg2: memref<128x128xf32, #tpu.memory_space<vmem>>, %arg3: memref<32x128xf32, #tpu.memory_space<vmem>>) attributes {dimension_semantics = [#tpu.dimension_semantics<parallel>], iteration_bounds = array<i64: 3>, scalar_prefetch = 0 : i64, scratch_operands = 0 : i64, tpu.core_type = #tpu.core_type<tc>, window_params = [{transform_indices = @transform_0, window_bounds = array<i64: 32, 128>}, {pipeline_mode = #tpu.pipeline_mode<synchronous>, transform_indices = @transform_1, window_bounds = array<i64: 128, 128>}, {transform_indices = @transform_2, window_bounds = array<i64: 32, 128>}]} {
    %c0 = arith.constant 0 : index
    %c0_0 = arith.constant 0 : index
    %0 = vector.load %arg1[%c0, %c0_0] : memref<32x128xf32, #tpu.memory_space<vmem>>, vector<32x128xf32>
    %c0_1 = arith.constant 0 : index
    %c0_2 = arith.constant 0 : index
    %1 = vector.load %arg2[%c0_1, %c0_2] : memref<128x128xf32, #tpu.memory_space<vmem>>, vector<128x128xf32>
    %cst = arith.constant dense<0.000000e+00> : vector<32x128xf32>
    %2 = tpu.matmul %0, %1, %cst {dimension_numbers = #tpu.dot_dimension_numbers<[1], [0], [0], [1], [0, 0, 1, 1], [], []>} : vector<32x128xf32>, vector<128x128xf32>, vector<32x128xf32> -> vector<32x128xf32>
    %c0_3 = arith.constant 0 : index
    %c0_4 = arith.constant 0 : index
    %3 = vector.load %arg3[%c0_3, %c0_4] : memref<32x128xf32, #tpu.memory_space<vmem>>, vector<32x128xf32>
    tpu.vector_store %arg3[%c0_3, %c0_4], %2 {strides = array<i32>} : memref<32x128xf32, #tpu.memory_space<vmem>>, vector<32x128xf32>,
    return
  }
  func.func @transform_0(%arg0: i32) -> (i32, i32) {
    %c0_i32 = arith.constant 0 : i32
    %c0_i32_0 = arith.constant 0 : i32
    return %arg0, %c0_i32 : i32, i32
  }
  func.func @transform_1(%arg0: i32) -> (i32, i32) {
    %c0_i32 = arith.constant 0 : i32
    %c0_i32_0 = arith.constant 0 : i32
    %c0_i32_1 = arith.constant 0 : i32
    return %c0_i32, %c0_i32_0 : i32, i32
  }
  func.func @transform_2(%arg0: i32) -> (i32, i32) {
    %c0_i32 = arith.constant 0 : i32
    %c0_i32_0 = arith.constant 0 : i32
    return %arg0, %c0_i32 : i32, i32
  }
}

module attributes {stable_mosaic.version = 11 : i64} {
  func.func @_gat_attn_kernel(%arg0: i32, %arg1: memref<32x128xf32, #tpu.memory_space<vmem>>, %arg2: memref<96x128xf32, #tpu.memory_space<vmem>>, %arg3: memref<32x96xf32, #tpu.memory_space<vmem>>, %arg4: memref<1x128xf32, #tpu.memory_space<vmem>>, %arg5: memref<1x128xf32, #tpu.memory_space<vmem>>, %arg6: memref<1x128xf32, #tpu.memory_space<vmem>>, %arg7: memref<32x128xf32, #tpu.memory_space<vmem>>) attributes {dimension_semantics = [#tpu.dimension_semantics<parallel>], iteration_bounds = array<i64: 3>, scalar_prefetch = 0 : i64, scratch_operands = 0 : i64, tpu.core_type = #tpu.core_type<tc>, window_params = [{transform_indices = @transform_0, window_bounds = array<i64: 32, 128>}, {pipeline_mode = #tpu.pipeline_mode<synchronous>, transform_indices = @transform_1, window_bounds = array<i64: 96, 128>}, {transform_indices = @transform_2, window_bounds = array<i64: 32, 96>}, {pipeline_mode = #tpu.pipeline_mode<synchronous>, transform_indices = @transform_3, window_bounds = array<i64: 1, 128>}, {pipeline_mode = #tpu.pipeline_mode<synchronous>, transform_indices = @transform_4, window_bounds = array<i64: 1, 128>}, {pipeline_mode = #tpu.pipeline_mode<synchronous>, transform_indices = @transform_5, window_bounds = array<i64: 1, 128>}, {transform_indices = @transform_6, window_bounds = array<i64: 32, 128>}]} {
    %c0 = arith.constant 0 : index
    %c0_0 = arith.constant 0 : index
    %0 = vector.load %arg1[%c0, %c0_0] : memref<32x128xf32, #tpu.memory_space<vmem>>, vector<32x128xf32>
    %c0_1 = arith.constant 0 : index
    %c0_2 = arith.constant 0 : index
    %1 = vector.load %arg2[%c0_1, %c0_2] : memref<96x128xf32, #tpu.memory_space<vmem>>, vector<96x128xf32>
    %c0_3 = arith.constant 0 : index
    %c0_4 = arith.constant 0 : index
    %2 = vector.load %arg5[%c0_3, %c0_4] : memref<1x128xf32, #tpu.memory_space<vmem>>, vector<1x128xf32>
    %3 = vector.broadcast %2 : vector<1x128xf32> to vector<32x128xf32>
    %4 = arith.mulf %0, %3 : vector<32x128xf32>
    %cst = arith.constant dense<0.000000e+00> : vector<32xf32>
    %5 = vector.multi_reduction <add>, %4, %cst [1] : vector<32x128xf32> to vector<32xf32>
    %6 = vector.shape_cast %5 : vector<32xf32> to vector<32x1xf32>
    %c0_5 = arith.constant 0 : index
    %c0_6 = arith.constant 0 : index
    %7 = vector.load %arg4[%c0_5, %c0_6] : memref<1x128xf32, #tpu.memory_space<vmem>>, vector<1x128xf32>
    %cst_7 = arith.constant dense<0.000000e+00> : vector<1x96xf32>
    %8 = tpu.matmul %7, %1, %cst_7 {dimension_numbers = #tpu.dot_dimension_numbers<[1], [1], [0], [0], [0, 0, 1, 0], [], []>} : vector<1x128xf32>, vector<96x128xf32>, vector<1x96xf32> -> vector<1x96xf32>
    %9 = vector.broadcast %6 : vector<32x1xf32> to vector<32x96xf32>
    %10 = vector.broadcast %8 : vector<1x96xf32> to vector<32x96xf32>
    %11 = arith.addf %9, %10 : vector<32x96xf32>
    %cst_8 = arith.constant 0.000000e+00 : f32
    %12 = vector.broadcast %cst_8 : f32 to vector<32x96xf32>
    %13 = arith.cmpf ogt, %11, %12 : vector<32x96xf32>
    %cst_9 = arith.constant 2.000000e-01 : f32
    %14 = vector.broadcast %cst_9 : f32 to vector<32x96xf32>
    %15 = arith.mulf %14, %11 : vector<32x96xf32>
    %16 = arith.select %13, %11, %15 : vector<32x96xi1>, vector<32x96xf32>
    %c0_10 = arith.constant 0 : index
    %c0_11 = arith.constant 0 : index
    %17 = vector.load %arg3[%c0_10, %c0_11] : memref<32x96xf32, #tpu.memory_space<vmem>>, vector<32x96xf32>
    %cst_12 = arith.constant 0.000000e+00 : f32
    %18 = vector.broadcast %cst_12 : f32 to vector<32x96xf32>
    %19 = arith.cmpf ogt, %17, %18 : vector<32x96xf32>
    %cst_13 = arith.constant -1.000000e+30 : f32
    %20 = vector.broadcast %cst_13 : f32 to vector<32x96xf32>
    %21 = arith.select %19, %16, %20 : vector<32x96xi1>, vector<32x96xf32>
    %cst_14 = arith.constant dense<0xFF800000> : vector<32xf32>
    %22 = vector.multi_reduction <maximumf>, %21, %cst_14 [1] : vector<32x96xf32> to vector<32xf32>
    %23 = vector.shape_cast %22 : vector<32xf32> to vector<32x1xf32>
    %24 = vector.broadcast %23 : vector<32x1xf32> to vector<32x96xf32>
    %25 = arith.subf %21, %24 : vector<32x96xf32>
    %26 = math.exp %25 : vector<32x96xf32>
    %cst_15 = arith.constant 0.000000e+00 : f32
    %27 = vector.broadcast %cst_15 : f32 to vector<32x96xf32>
    %28 = arith.select %19, %26, %27 : vector<32x96xi1>, vector<32x96xf32>
    %cst_16 = arith.constant dense<0.000000e+00> : vector<32xf32>
    %29 = vector.multi_reduction <add>, %28, %cst_16 [1] : vector<32x96xf32> to vector<32xf32>
    %30 = vector.shape_cast %29 : vector<32xf32> to vector<32x1xf32>
    %31 = vector.broadcast %30 : vector<32x1xf32> to vector<32x96xf32>
    %32 = arith.divf %28, %31 : vector<32x96xf32>
    %cst_17 = arith.constant dense<0.000000e+00> : vector<32x128xf32>
    %33 = tpu.matmul %32, %1, %cst_17 {dimension_numbers = #tpu.dot_dimension_numbers<[1], [0], [0], [1], [0, 0, 1, 1], [], []>} : vector<32x96xf32>, vector<96x128xf32>, vector<32x128xf32> -> vector<32x128xf32>
    %c0_18 = arith.constant 0 : index
    %c0_19 = arith.constant 0 : index
    %34 = vector.load %arg6[%c0_18, %c0_19] : memref<1x128xf32, #tpu.memory_space<vmem>>, vector<1x128xf32>
    %35 = vector.broadcast %34 : vector<1x128xf32> to vector<32x128xf32>
    %36 = arith.addf %33, %35 : vector<32x128xf32>
    %cst_20 = arith.constant 0.000000e+00 : f32
    %37 = vector.broadcast %cst_20 : f32 to vector<32x128xf32>
    %38 = arith.maximumf %36, %37 : vector<32x128xf32>
    %c0_21 = arith.constant 0 : index
    %c0_22 = arith.constant 0 : index
    %39 = vector.load %arg7[%c0_21, %c0_22] : memref<32x128xf32, #tpu.memory_space<vmem>>, vector<32x128xf32>
    tpu.vector_store %arg7[%c0_21, %c0_22], %38 {strides = array<i32>} : memref<32x128xf32, #tpu.memory_space<vmem>>, vector<32x128xf32>,
    return
  }
  func.func @transform_0(%arg0: i32) -> (i32, i32) {
    %c0_i32 = arith.constant 0 : i32
    %c0_i32_0 = arith.constant 0 : i32
    return %arg0, %c0_i32 : i32, i32
  }
  func.func @transform_1(%arg0: i32) -> (i32, i32) {
    %c0_i32 = arith.constant 0 : i32
    %c0_i32_0 = arith.constant 0 : i32
    %c0_i32_1 = arith.constant 0 : i32
    return %c0_i32, %c0_i32_0 : i32, i32
  }
  func.func @transform_2(%arg0: i32) -> (i32, i32) {
    %c0_i32 = arith.constant 0 : i32
    %c0_i32_0 = arith.constant 0 : i32
    return %arg0, %c0_i32 : i32, i32
  }
  func.func @transform_3(%arg0: i32) -> (i32, i32) {
    %c0_i32 = arith.constant 0 : i32
    %c0_i32_0 = arith.constant 0 : i32
    %c0_i32_1 = arith.constant 0 : i32
    return %c0_i32, %c0_i32_0 : i32, i32
  }
  func.func @transform_4(%arg0: i32) -> (i32, i32) {
    %c0_i32 = arith.constant 0 : i32
    %c0_i32_0 = arith.constant 0 : i32
    %c0_i32_1 = arith.constant 0 : i32
    return %c0_i32, %c0_i32_0 : i32, i32
  }
  func.func @transform_5(%arg0: i32) -> (i32, i32) {
    %c0_i32 = arith.constant 0 : i32
    %c0_i32_0 = arith.constant 0 : i32
    %c0_i32_1 = arith.constant 0 : i32
    return %c0_i32, %c0_i32_0 : i32, i32
  }
  func.func @transform_6(%arg0: i32) -> (i32, i32) {
    %c0_i32 = arith.constant 0 : i32
    %c0_i32_0 = arith.constant 0 : i32
    return %arg0, %c0_i32 : i32, i32
  }
}

module attributes {stable_mosaic.version = 11 : i64} {
  func.func @_gat_attn_kernel(%arg0: i32, %arg1: memref<32x128xf32, #tpu.memory_space<vmem>>, %arg2: memref<96x128xf32, #tpu.memory_space<vmem>>, %arg3: memref<32x96xf32, #tpu.memory_space<vmem>>, %arg4: memref<1x128xf32, #tpu.memory_space<vmem>>, %arg5: memref<1x128xf32, #tpu.memory_space<vmem>>, %arg6: memref<1x128xf32, #tpu.memory_space<vmem>>, %arg7: memref<32x128xf32, #tpu.memory_space<vmem>>) attributes {dimension_semantics = [#tpu.dimension_semantics<parallel>], iteration_bounds = array<i64: 3>, scalar_prefetch = 0 : i64, scratch_operands = 0 : i64, tpu.core_type = #tpu.core_type<tc>, window_params = [{transform_indices = @transform_0, window_bounds = array<i64: 32, 128>}, {pipeline_mode = #tpu.pipeline_mode<synchronous>, transform_indices = @transform_1, window_bounds = array<i64: 96, 128>}, {transform_indices = @transform_2, window_bounds = array<i64: 32, 96>}, {pipeline_mode = #tpu.pipeline_mode<synchronous>, transform_indices = @transform_3, window_bounds = array<i64: 1, 128>}, {pipeline_mode = #tpu.pipeline_mode<synchronous>, transform_indices = @transform_4, window_bounds = array<i64: 1, 128>}, {pipeline_mode = #tpu.pipeline_mode<synchronous>, transform_indices = @transform_5, window_bounds = array<i64: 1, 128>}, {transform_indices = @transform_6, window_bounds = array<i64: 32, 128>}]} {
    %c0 = arith.constant 0 : index
    %c0_0 = arith.constant 0 : index
    %0 = vector.load %arg1[%c0, %c0_0] : memref<32x128xf32, #tpu.memory_space<vmem>>, vector<32x128xf32>
    %c0_1 = arith.constant 0 : index
    %c0_2 = arith.constant 0 : index
    %1 = vector.load %arg2[%c0_1, %c0_2] : memref<96x128xf32, #tpu.memory_space<vmem>>, vector<96x128xf32>
    %c0_3 = arith.constant 0 : index
    %c0_4 = arith.constant 0 : index
    %2 = vector.load %arg5[%c0_3, %c0_4] : memref<1x128xf32, #tpu.memory_space<vmem>>, vector<1x128xf32>
    %3 = vector.broadcast %2 : vector<1x128xf32> to vector<32x128xf32>
    %4 = arith.mulf %0, %3 : vector<32x128xf32>
    %cst = arith.constant dense<0.000000e+00> : vector<32xf32>
    %5 = vector.multi_reduction <add>, %4, %cst [1] : vector<32x128xf32> to vector<32xf32>
    %6 = vector.shape_cast %5 : vector<32xf32> to vector<32x1xf32>
    %c0_5 = arith.constant 0 : index
    %c0_6 = arith.constant 0 : index
    %7 = vector.load %arg4[%c0_5, %c0_6] : memref<1x128xf32, #tpu.memory_space<vmem>>, vector<1x128xf32>
    %cst_7 = arith.constant dense<0.000000e+00> : vector<1x96xf32>
    %8 = tpu.matmul %7, %1, %cst_7 {dimension_numbers = #tpu.dot_dimension_numbers<[1], [1], [0], [0], [0, 0, 1, 0], [], []>} : vector<1x128xf32>, vector<96x128xf32>, vector<1x96xf32> -> vector<1x96xf32>
    %9 = vector.broadcast %6 : vector<32x1xf32> to vector<32x96xf32>
    %10 = vector.broadcast %8 : vector<1x96xf32> to vector<32x96xf32>
    %11 = arith.addf %9, %10 : vector<32x96xf32>
    %cst_8 = arith.constant 0.000000e+00 : f32
    %12 = vector.broadcast %cst_8 : f32 to vector<32x96xf32>
    %13 = arith.cmpf ogt, %11, %12 : vector<32x96xf32>
    %cst_9 = arith.constant 2.000000e-01 : f32
    %14 = vector.broadcast %cst_9 : f32 to vector<32x96xf32>
    %15 = arith.mulf %14, %11 : vector<32x96xf32>
    %16 = arith.select %13, %11, %15 : vector<32x96xi1>, vector<32x96xf32>
    %c0_10 = arith.constant 0 : index
    %c0_11 = arith.constant 0 : index
    %17 = vector.load %arg3[%c0_10, %c0_11] : memref<32x96xf32, #tpu.memory_space<vmem>>, vector<32x96xf32>
    %cst_12 = arith.constant 0.000000e+00 : f32
    %18 = vector.broadcast %cst_12 : f32 to vector<32x96xf32>
    %19 = arith.cmpf ogt, %17, %18 : vector<32x96xf32>
    %cst_13 = arith.constant -1.000000e+30 : f32
    %20 = vector.broadcast %cst_13 : f32 to vector<32x96xf32>
    %21 = arith.select %19, %16, %20 : vector<32x96xi1>, vector<32x96xf32>
    %cst_14 = arith.constant dense<0xFF800000> : vector<32xf32>
    %22 = vector.multi_reduction <maximumf>, %21, %cst_14 [1] : vector<32x96xf32> to vector<32xf32>
    %23 = vector.shape_cast %22 : vector<32xf32> to vector<32x1xf32>
    %24 = vector.broadcast %23 : vector<32x1xf32> to vector<32x96xf32>
    %25 = arith.subf %21, %24 : vector<32x96xf32>
    %26 = math.exp %25 : vector<32x96xf32>
    %cst_15 = arith.constant 0.000000e+00 : f32
    %27 = vector.broadcast %cst_15 : f32 to vector<32x96xf32>
    %28 = arith.select %19, %26, %27 : vector<32x96xi1>, vector<32x96xf32>
    %cst_16 = arith.constant dense<0.000000e+00> : vector<32xf32>
    %29 = vector.multi_reduction <add>, %28, %cst_16 [1] : vector<32x96xf32> to vector<32xf32>
    %30 = vector.shape_cast %29 : vector<32xf32> to vector<32x1xf32>
    %31 = vector.broadcast %30 : vector<32x1xf32> to vector<32x96xf32>
    %32 = arith.divf %28, %31 : vector<32x96xf32>
    %cst_17 = arith.constant dense<0.000000e+00> : vector<32x128xf32>
    %33 = tpu.matmul %32, %1, %cst_17 {dimension_numbers = #tpu.dot_dimension_numbers<[1], [0], [0], [1], [0, 0, 1, 1], [], []>} : vector<32x96xf32>, vector<96x128xf32>, vector<32x128xf32> -> vector<32x128xf32>
    %c0_18 = arith.constant 0 : index
    %c0_19 = arith.constant 0 : index
    %34 = vector.load %arg6[%c0_18, %c0_19] : memref<1x128xf32, #tpu.memory_space<vmem>>, vector<1x128xf32>
    %35 = vector.broadcast %34 : vector<1x128xf32> to vector<32x128xf32>
    %36 = arith.addf %33, %35 : vector<32x128xf32>
    %c0_20 = arith.constant 0 : index
    %c0_21 = arith.constant 0 : index
    %37 = vector.load %arg7[%c0_20, %c0_21] : memref<32x128xf32, #tpu.memory_space<vmem>>, vector<32x128xf32>
    tpu.vector_store %arg7[%c0_20, %c0_21], %36 {strides = array<i32>} : memref<32x128xf32, #tpu.memory_space<vmem>>, vector<32x128xf32>,
    return
  }
  func.func @transform_0(%arg0: i32) -> (i32, i32) {
    %c0_i32 = arith.constant 0 : i32
    %c0_i32_0 = arith.constant 0 : i32
    return %arg0, %c0_i32 : i32, i32
  }
  func.func @transform_1(%arg0: i32) -> (i32, i32) {
    %c0_i32 = arith.constant 0 : i32
    %c0_i32_0 = arith.constant 0 : i32
    %c0_i32_1 = arith.constant 0 : i32
    return %c0_i32, %c0_i32_0 : i32, i32
  }
  func.func @transform_2(%arg0: i32) -> (i32, i32) {
    %c0_i32 = arith.constant 0 : i32
    %c0_i32_0 = arith.constant 0 : i32
    return %arg0, %c0_i32 : i32, i32
  }
  func.func @transform_3(%arg0: i32) -> (i32, i32) {
    %c0_i32 = arith.constant 0 : i32
    %c0_i32_0 = arith.constant 0 : i32
    %c0_i32_1 = arith.constant 0 : i32
    return %c0_i32, %c0_i32_0 : i32, i32
  }
  func.func @transform_4(%arg0: i32) -> (i32, i32) {
    %c0_i32 = arith.constant 0 : i32
    %c0_i32_0 = arith.constant 0 : i32
    %c0_i32_1 = arith.constant 0 : i32
    return %c0_i32, %c0_i32_0 : i32, i32
  }
  func.func @transform_5(%arg0: i32) -> (i32, i32) {
    %c0_i32 = arith.constant 0 : i32
    %c0_i32_0 = arith.constant 0 : i32
    %c0_i32_1 = arith.constant 0 : i32
    return %c0_i32, %c0_i32_0 : i32, i32
  }
  func.func @transform_6(%arg0: i32) -> (i32, i32) {
    %c0_i32 = arith.constant 0 : i32
    %c0_i32_0 = arith.constant 0 : i32
    return %arg0, %c0_i32 : i32, i32
  }
}

</mosaic_0001>

<llo_original>
// kernel: gat_forward.7
$region0: #{gat_forward.7}
  #allocation0 [shape = 'u32[]', space=smem, size = 0x4, offset = 0x4, fixed_abs, tag = 'smem constant byte address 0x4 - core index']
  #allocation1 [shape = 'u32[144,128]{1,0:T(1,128)}', space=vmem, size = 0x12000, scoped, tag = 'internal scratch']
  %s0 = inlined_call_operand.vmem [shape: f32[96,128], index: 0, kind: input, shape index: {}, may-alias: {0,1}]
  %s1 = inlined_call_operand.vmem [shape: f32[96,128], index: 1, kind: input, shape index: {}, may-alias: {0,1}]
  %s2 = inlined_call_operand.vmem [shape: f32[96,96], index: 2, kind: input, shape index: {}]
  %s3 = inlined_call_operand.vmem [shape: f32[1,128], index: 3, kind: input, shape index: {}]
  %s4 = inlined_call_operand.vmem [shape: f32[1,128], index: 4, kind: input, shape index: {}]
  %s5 = inlined_call_operand.vmem [shape: f32[1,128], index: 5, kind: input, shape index: {}]
  %s6 = inlined_call_operand.vmem [shape: f32[96,128], index: 6, kind: output, shape index: {}]
  %s7 = sld [smem:[#allocation0]]
  $region57: #{gat_forward.7} parent=0
    _
  %s9 = ssub.s32 1, %s7
  %s10 = scalar_select 0, %s9, %s7
  loop: start=0, step=1, limit=5
  $region2: #{gat_forward.7} parent=0 // loop_pre_header
    _
  $region3: #{gat_forward.7} parent=0 // loop_header
    %s12 = sphi 0, %s16
    %p13 = scmp.ge.s32.totalorder %s12, 5
    %s22 = sphi 0, %s24
    %s25 = sphi 0, %s22
    %s26 = sphi 0, %s25
    %s42 = sphi 0, %s26
    %s46 = sphi 0, %s46
    %s48 = sphi 0, %s46
    %s49 = sphi 0, %s48
    %s63 = sphi 0, %s49
    %s69 = sphi 0, %s71
    %s72 = sphi 0, %s69
    %s73 = sphi 0, %s72
    %s89 = sphi 0, %s73
    %s93 = sphi 0, %s93
    %s95 = sphi 0, %s93
    %s96 = sphi 0, %s95
    %s110 = sphi 0, %s96
    %s114 = sphi 0, %s114
    %s116 = sphi 0, %s114
    %s117 = sphi 0, %s116
    %s131 = sphi 0, %s117
    %s135 = sphi 0, %s135
    %s137 = sphi 0, %s135
    %s138 = sphi 0, %s137
    %s152 = sphi 0, %s138
    %s158 = sphi 0, %s160
    %s161 = sphi 0, %s158
    %s162 = sphi 0, %s161
    %s178 = sphi 0, %s162
  $region4: #{gat_forward.7} parent=0 // loop_header_branch
    %15 = sbr.rel (%p13) target = $region8
  $region5: #{gat_forward.7} parent=0 // loop_body
    %s17 = ssub.s32 %s12, 1
    %s18 = ssub.s32 %s12, 2
    %s19 = sadd.s32 %s12, 1
    %s20 = ssub.s32 %s12, %s19
    %p21 = scmp.eq.s32.totalorder %s20, 0
    %s23 = sadd.s32 %s22, 1
    %s24 = scalar_select %p21, %s22, %s23
    %p27 = pneg %p21
    %p28 = scmp.eq.s32.totalorder %s12, 2
    %p29 = por %p27, %p28
    %p30 = scmp.ne.s32.totalorder %s22, %s25
    %p31 = scmp.eq.s32.totalorder %s12, 0
    %p32 = por %p30, %p31
    %p33 = scmp.ne.s32.totalorder %s22, %s25
    %p34 = scmp.eq.s32.totalorder %s17, 2
    %p35 = por %p33, %p34
    %p36 = scmp.ne.s32.totalorder %s25, %s26
    %p37 = scmp.eq.s32.totalorder %s17, 0
    %p38 = por %p36, %p37
    %p39 = scmp.ne.s32.totalorder %s25, %s26
    %p40 = scmp.eq.s32.totalorder %s18, 2
    %p41 = por %p39, %p40
    %p43 = scmp.ne.s32.totalorder %s26, %s42
    %p44 = scmp.eq.s32.totalorder %s18, 0
    %p45 = por %p43, %p44
    %s47 = sadd.s32 %s46, 1
    %p50 = scmp.eq.s32.totalorder %s12, 2
    %p51 = scmp.ne.s32.totalorder %s46, %s48
    %p52 = scmp.eq.s32.totalorder %s12, 0
    %p53 = por %p51, %p52
    %p54 = scmp.ne.s32.totalorder %s46, %s48
    %p55 = scmp.eq.s32.totalorder %s17, 2
    %p56 = por %p54, %p55
    %p57 = scmp.ne.s32.totalorder %s48, %s49
    %p58 = scmp.eq.s32.totalorder %s17, 0
    %p59 = por %p57, %p58
    %p60 = scmp.ne.s32.totalorder %s48, %s49
    %p61 = scmp.eq.s32.totalorder %s18, 2
    %p62 = por %p60, %p61
    %p64 = scmp.ne.s32.totalorder %s49, %s63
    %p65 = scmp.eq.s32.totalorder %s18, 0
    %p66 = por %p64, %p65
    %s67 = ssub.s32 %s12, %s19
    %p68 = scmp.eq.s32.totalorder %s67, 0
    %s70 = sadd.s32 %s69, 1
    %s71 = scalar_select %p68, %s69, %s70
    %p74 = pneg %p68
    %p75 = scmp.eq.s32.totalorder %s12, 2
    %p76 = por %p74, %p75
    %p77 = scmp.ne.s32.totalorder %s69, %s72
    %p78 = scmp.eq.s32.totalorder %s12, 0
    %p79 = por %p77, %p78
    %p80 = scmp.ne.s32.totalorder %s69, %s72
    %p81 = scmp.eq.s32.totalorder %s17, 2
    %p82 = por %p80, %p81
    %p83 = scmp.ne.s32.totalorder %s72, %s73
    %p84 = scmp.eq.s32.totalorder %s17, 0
    %p85 = por %p83, %p84
    %p86 = scmp.ne.s32.totalorder %s72, %s73
    %p87 = scmp.eq.s32.totalorder %s18, 2
    %p88 = por %p86, %p87
    %p90 = scmp.ne.s32.totalorder %s73, %s89
    %p91 = scmp.eq.s32.totalorder %s18, 0
    %p92 = por %p90, %p91
    %s94 = sadd.s32 %s93, 1
    %p97 = scmp.eq.s32.totalorder %s12, 2
    %p98 = scmp.ne.s32.totalorder %s93, %s95
    %p99 = scmp.eq.s32.totalorder %s12, 0
    %p100 = por %p98, %p99
    %p101 = scmp.ne.s32.totalorder %s93, %s95
    %p102 = scmp.eq.s32.totalorder %s17, 2
    %p103 = por %p101, %p102
    %p104 = scmp.ne.s32.totalorder %s95, %s96
    %p105 = scmp.eq.s32.totalorder %s17, 0
    %p106 = por %p104, %p105
    %p107 = scmp.ne.s32.totalorder %s95, %s96
    %p108 = scmp.eq.s32.totalorder %s18, 2
    %p109 = por %p107, %p108
    %p111 = scmp.ne.s32.totalorder %s96, %s110
    %p112 = scmp.eq.s32.totalorder %s18, 0
    %p113 = por %p111, %p112
    %s115 = sadd.s32 %s114, 1
    %p118 = scmp.eq.s32.totalorder %s12, 2
    %p119 = scmp.ne.s32.totalorder %s114, %s116
    %p120 = scmp.eq.s32.totalorder %s12, 0
    %p121 = por %p119, %p120
    %p122 = scmp.ne.s32.totalorder %s114, %s116
    %p123 = scmp.eq.s32.totalorder %s17, 2
    %p124 = por %p122, %p123
    %p125 = scmp.ne.s32.totalorder %s116, %s117
    %p126 = scmp.eq.s32.totalorder %s17, 0
    %p127 = por %p125, %p126
    %p128 = scmp.ne.s32.totalorder %s116, %s117
    %p129 = scmp.eq.s32.totalorder %s18, 2
    %p130 = por %p128, %p129
    %p132 = scmp.ne.s32.totalorder %s117, %s131
    %p133 = scmp.eq.s32.totalorder %s18, 0
    %p134 = por %p132, %p133
    %s136 = sadd.s32 %s135, 1
    %p139 = scmp.eq.s32.totalorder %s12, 2
    %p140 = scmp.ne.s32.totalorder %s135, %s137
    %p141 = scmp.eq.s32.totalorder %s12, 0
    %p142 = por %p140, %p141
    %p143 = scmp.ne.s32.totalorder %s135, %s137
    %p144 = scmp.eq.s32.totalorder %s17, 2
    %p145 = por %p143, %p144
    %p146 = scmp.ne.s32.totalorder %s137, %s138
    %p147 = scmp.eq.s32.totalorder %s17, 0
    %p148 = por %p146, %p147
    %p149 = scmp.ne.s32.totalorder %s137, %s138
    %p150 = scmp.eq.s32.totalorder %s18, 2
    %p151 = por %p149, %p150
    %p153 = scmp.ne.s32.totalorder %s138, %s152
    %p154 = scmp.eq.s32.totalorder %s18, 0
    %p155 = por %p153, %p154
    %s156 = ssub.s32 %s12, %s19
    %p157 = scmp.eq.s32.totalorder %s156, 0
    %s159 = sadd.s32 %s158, 1
    %s160 = scalar_select %p157, %s158, %s159
    %p163 = pneg %p157
    %p164 = scmp.eq.s32.totalorder %s12, 2
    %p165 = por %p163, %p164
    %p166 = scmp.ne.s32.totalorder %s158, %s161
    %p167 = scmp.eq.s32.totalorder %s12, 0
    %p168 = por %p166, %p167
    %p169 = scmp.ne.s32.totalorder %s158, %s161
    %p170 = scmp.eq.s32.totalorder %s17, 2
    %p171 = por %p169, %p170
    %p172 = scmp.ne.s32.totalorder %s161, %s162
    %p173 = scmp.eq.s32.totalorder %s17, 0
    %p174 = por %p172, %p173
    %p175 = scmp.ne.s32.totalorder %s161, %s162
    %p176 = scmp.eq.s32.totalorder %s18, 2
    %p177 = por %p175, %p176
    %p179 = scmp.ne.s32.totalorder %s162, %s178
    %p180 = scmp.eq.s32.totalorder %s18, 0
    %p181 = por %p179, %p180
    %p182 = scmp.le.s32.totalorder 1, %s12
    %p183 = scmp.lt.s32.totalorder %s12, 4
    %p184 = pnand %p182, %p183
    %p185 = pneg %p184
    // Predicated region
    $region9: #{gat_forward.7} parent=5 // pred_check
      _
    $region10: #{gat_forward.7} parent=5 // pred_check_branch
      %187 = sbr.rel (%p184) target = $region12
    $region11: #{gat_forward.7} parent=5 // pred_region
      %s188 = ssub.s32 %s12, 1
      // Predicated region
      $region13: #{gat_forward.7} parent=11 // pred_check
        %p189 = pneg %p59
      $region14: #{gat_forward.7} parent=11 // pred_check_branch
        %191 = sbr.rel (%p189) target = $region16
      $region15: #{gat_forward.7} parent=11 // pred_region
        _
      $region16: #{gat_forward.7} parent=11 // pred_fallthru
        _
      // Predicated region
      $region17: #{gat_forward.7} parent=11 // pred_check
        %p192 = pneg %p106
      $region18: #{gat_forward.7} parent=11 // pred_check_branch
        %194 = sbr.rel (%p192) target = $region20
      $region19: #{gat_forward.7} parent=11 // pred_region
        _
      $region20: #{gat_forward.7} parent=11 // pred_fallthru
        _
      // Predicated region
      $region21: #{gat_forward.7} parent=11 // pred_check
        %p195 = pneg %p127
      $region22: #{gat_forward.7} parent=11 // pred_check_branch
        %197 = sbr.rel (%p195) target = $region24
      $region23: #{gat_forward.7} parent=11 // pred_region
        _
      $region24: #{gat_forward.7} parent=11 // pred_fallthru
        _
      // Predicated region
      $region25: #{gat_forward.7} parent=11 // pred_check
        %p198 = pneg %p148
      $region26: #{gat_forward.7} parent=11 // pred_check_branch
        %200 = sbr.rel (%p198) target = $region28
      $region27: #{gat_forward.7} parent=11 // pred_region
        _
      $region28: #{gat_forward.7} parent=11 // pred_fallthru
        _
    $region12: #{gat_forward.7} parent=5 // pred_fallthru
      _
    %p201 = scmp.lt.s32.totalorder %s12, 3
    // Predicated region
    $region29: #{gat_forward.7} parent=5 // pred_check
      %p202 = pneg %p201
    $region30: #{gat_forward.7} parent=5 // pred_check_branch
      %204 = sbr.rel (%p202) target = $region32
    $region31: #{gat_forward.7} parent=5 // pred_region
      // Predicated region
      $region33: #{gat_forward.7} parent=31 // pred_check
        %p205 = pneg %p32
      $region34: #{gat_forward.7} parent=31 // pred_check_branch
        %207 = sbr.rel (%p205) target = $region36
      $region35: #{gat_forward.7} parent=31 // pred_region
        %s208 = smul.u32 4, %s12
        %p209 = scmp.lt.s32.totalorder %s208, 11
        %s210 = scalar_select %p209, %s208, 11
        %s211 = smul.addr %s210, 8
        %s212 = scalar_lea.vmem %s0, %s211
        %s213 = smul.u32 4, %s12
      $region36: #{gat_forward.7} parent=31 // pred_fallthru
        _
      // Predicated region
      $region37: #{gat_forward.7} parent=31 // pred_check
        %p214 = pneg %p79
      $region38: #{gat_forward.7} parent=31 // pred_check_branch
        %216 = sbr.rel (%p214) target = $region40
      $region39: #{gat_forward.7} parent=31 // pred_region
        %s217 = smul.u32 4, %s12
        %p218 = scmp.lt.s32.totalorder %s217, 11
        %s219 = scalar_select %p218, %s217, 11
        %s220 = smul.addr %s219, 8
        %s221 = scalar_lea.vmem %s2, %s220
        %s222 = smul.u32 4, %s12
      $region40: #{gat_forward.7} parent=31 // pred_fallthru
        _
    $region32: #{gat_forward.7} parent=5 // pred_fallthru
      _
    %p223 = scmp.le.s32.totalorder 1, %s12
    %p224 = scmp.lt.s32.totalorder %s12, 4
    %p225 = pnand %p223, %p224
    %p226 = pneg %p225
    // Predicated region
    $region41: #{gat_forward.7} parent=5 // pred_check
      _
    $region42: #{gat_forward.7} parent=5 // pred_check_branch
      %228 = sbr.rel (%p225) target = $region44
    $region43: #{gat_forward.7} parent=5 // pred_region
      %s229 = ssub.s32 %s12, 1
      %s230 = smul.u32 4, %s17
      %p231 = scmp.lt.s32.totalorder %s230, 11
      %s232 = scalar_select %p231, %s230, 11
      %s233 = smul.addr %s232, 8
      %s234 = scalar_lea.vmem %s0, %s233
      %p235 = pneg %p38
      %p236 = pneg %p35
      %p237 = pneg %p59
      %p238 = pneg %p56
      %s239 = smul.u32 4, %s17
      %p240 = scmp.lt.s32.totalorder %s239, 11
      %s241 = scalar_select %p240, %s239, 11
      %s242 = smul.addr %s241, 8
      %s243 = scalar_lea.vmem %s2, %s242
      %p244 = pneg %p85
      %p245 = pneg %p82
      %p246 = pneg %p106
      %p247 = pneg %p103
      %p248 = pneg %p127
      %p249 = pneg %p124
      %p250 = pneg %p148
      %p251 = pneg %p145
      %p252 = pneg %p174
      %p253 = pneg %p171
      %s254 = smul.u32 4, %s17
      %p255 = scmp.lt.s32.totalorder %s254, 11
      %s256 = scalar_select %p255, %s254, 11
      %s257 = smul.addr %s256, 8
      %s258 = scalar_lea.vmem %s6, %s257
      %s259 = smul.u32 4, %s17
      %p260 = scmp.lt.s32.totalorder %s259, 11
      %s261 = scalar_select %p260, %s259, 11
      %s262 = smul.addr %s261, 8
      %s263 = scalar_lea.vmem %s0, %s262
      %s264 = smul.u32 4, %s17
      %s265 = smul.u32 4, %s17
      %p266 = scmp.lt.s32.totalorder %s265, 11
      %s267 = scalar_select %p266, %s265, 11
      %s268 = smul.addr %s267, 8
      %s269 = scalar_lea.vmem %s2, %s268
      %s270 = smul.u32 4, %s17
      %s271 = smul.u32 4, %s17
      %p272 = scmp.lt.s32.totalorder %s271, 11
      %s273 = scalar_select %p272, %s271, 11
      %s274 = smul.addr %s273, 8
      %s275 = scalar_lea.vmem %s6, %s274
      %s276 = smul.u32 4, %s17
      %v277 = vld [vmem:[%s263] sm:$0xff]
      %v278 = vld [vmem:[%s263 + $0x8] sm:$0xff]
      %v279 = vld [vmem:[%s263 + $0x10] sm:$0xff]
      %v280 = vld [vmem:[%s263 + $0x18] sm:$0xff]
      %v281 = vld [vmem:[%s1] sm:$0xff]
      %v282 = vld [vmem:[%s1 + $0x8] sm:$0xff]
      %v283 = vld [vmem:[%s1 + $0x10] sm:$0xff]
      %v284 = vld [vmem:[%s1 + $0x18] sm:$0xff]
      %v285 = vld [vmem:[%s1 + $0x20] sm:$0xff]
      %v286 = vld [vmem:[%s1 + $0x28] sm:$0xff]
      %v287 = vld [vmem:[%s1 + $0x30] sm:$0xff]
      %v288 = vld [vmem:[%s1 + $0x38] sm:$0xff]
      %v289 = vld [vmem:[%s1 + $0x40] sm:$0xff]
      %v290 = vld [vmem:[%s1 + $0x48] sm:$0xff]
      %v291 = vld [vmem:[%s1 + $0x50] sm:$0xff]
      %v292 = vld [vmem:[%s1 + $0x58] sm:$0xff]
      %v293 = vld [vmem:[%s4] sm:$0x1]
      %v295 = vlaneseq
      %v296 = vshrl.u32 %v295, 7
      %v297 = vsub.s32 0, %v296
      %v298 = vrot.slane %v293, %v297
      %v300 = vmul.f32 %v277, %v298
      %v301 = vmul.f32 %v278, %v298
      %v302 = vmul.f32 %v279, %v298
      %v303 = vmul.f32 %v280, %v298
      %304 = vadd.xlane.f32.xlu0 %v300
      %v305 = vpop.xlane.xlu0 %304
      %306 = vadd.xlane.f32.xlu0 %v301
      %v307 = vpop.xlane.xlu0 %306
      %308 = vadd.xlane.f32.xlu0 %v302
      %v309 = vpop.xlane.xlu0 %308
      %310 = vadd.xlane.f32.xlu0 %v303
      %v311 = vpop.xlane.xlu0 %310
      %v312 = vld [vmem:[%s3] sm:$0x1]
      %313 = vmatprep.subr.mxu0 0.0
      %314 = vmatpush1.xpose.msra.mxu0 0.0
      %315 = vmatprep.subr.mxu0 0.0
      %316 = vmatpush1.xpose.msra.mxu0 0.0
      %317 = vmatprep.subr.mxu0 0.0
      %318 = vmatpush1.xpose.msra.mxu0 0.0
      %319 = vmatprep.subr.mxu0 0.0
      %320 = vmatpush1.xpose.msra.mxu0 0.0
      %321 = vmatprep.subr.mxu0 0.0
      %322 = vmatpush1.xpose.msra.mxu0 %v292
      %323 = vmatprep.subr.mxu0 0.0
      %324 = vmatpush1.xpose.msra.mxu0 %v291
      %325 = vmatprep.subr.mxu0 0.0
      %326 = vmatpush1.xpose.msra.mxu0 %v290
      %327 = vmatprep.subr.mxu0 0.0
      %328 = vmatpush1.xpose.msra.mxu0 %v289
      %329 = vmatprep.subr.mxu0 0.0
      %330 = vmatpush1.xpose.msra.mxu0 %v288
      %331 = vmatprep.subr.mxu0 0.0
      %332 = vmatpush1.xpose.msra.mxu0 %v287
      %333 = vmatprep.subr.mxu0 0.0
      %334 = vmatpush1.xpose.msra.mxu0 %v286
      %335 = vmatprep.subr.mxu0 0.0
      %336 = vmatpush1.xpose.msra.mxu0 %v285
      %337 = vmatprep.subr.mxu0 0.0
      %338 = vmatpush1.xpose.msra.mxu0 %v284
      %339 = vmatprep.subr.mxu0 0.0
      %340 = vmatpush1.xpose.msra.mxu0 %v283
      %341 = vmatprep.subr.mxu0 0.0
      %342 = vmatpush1.xpose.msra.mxu0 %v282
      %343 = vmatprep.subr.mxu0 0.0
      %344 = vmatpush1.xpose.msra.mxu0 %v281
      %345 = vmatprep.subr.mxu0 0.0
      %346 = vmatpush2.xpose.msra.mxu0 0.0
      %347 = vmatprep.subr.mxu0 0.0
      %348 = vmatpush2.xpose.msra.mxu0 0.0
      %349 = vmatprep.subr.mxu0 0.0
      %350 = vmatpush2.xpose.msra.mxu0 0.0
      %351 = vmatprep.subr.mxu0 0.0
      %352 = vmatpush2.xpose.msra.mxu0 0.0
      %353 = vmatprep.subr.mxu0 0.0
      %354 = vmatpush2.xpose.msra.mxu0 0.0
      %355 = vmatprep.subr.mxu0 0.0
      %356 = vmatpush2.xpose.msra.mxu0 0.0
      %357 = vmatprep.subr.mxu0 0.0
      %358 = vmatpush2.xpose.msra.mxu0 0.0
      %359 = vmatprep.subr.mxu0 0.0
      %360 = vmatpush2.xpose.msra.mxu0 0.0
      %361 = vmatprep.subr.mxu0 0.0
      %362 = vmatpush2.xpose.msra.mxu0 0.0
      %363 = vmatprep.subr.mxu0 0.0
      %364 = vmatpush2.xpose.msra.mxu0 0.0
      %365 = vmatprep.subr.mxu0 0.0
      %366 = vmatpush2.xpose.msra.mxu0 0.0
      %367 = vmatprep.subr.mxu0 0.0
      %368 = vmatpush2.xpose.msra.mxu0 0.0
      %369 = vmatprep.subr.mxu0 0.0
      %370 = vmatpush2.xpose.msra.mxu0 0.0
      %371 = vmatprep.subr.mxu0 0.0
      %372 = vmatpush2.xpose.msra.mxu0 0.0
      %373 = vmatprep.subr.mxu0 0.0
      %374 = vmatpush2.xpose.msra.mxu0 0.0
      %375 = vmatprep.subr.mxu0 0.0
      %376 = vmatpush2.xpose.msra.mxu0 0.0
      %377 = vmatprep.mubr.f32.mxu0 0.0
      %378 = vmatmul.mubr.f32.gmra.mxu0 %v312
      %v379 = vpop.f32.mrf.mxu0
      %v380 = vadd.f32 0.0, %v379
      %v381 = vpop.f32.mrf.mxu0
      %382 = vdwg.mxu0
      %v383 = vlaneseq
      %v384 = vshrl.u32 %v383, 7
      %v385 = vsub.s32 0, %v384
      %v386 = vrot.slane %v380, %v385
      %v387 = vadd.f32 %v305, %v386
      %v388 = vadd.f32 %v307, %v386
      %v389 = vadd.f32 %v309, %v386
      %v390 = vadd.f32 %v311, %v386
      %vm391 = vcmp.gt.f32.partialorder %v387, 0.0
      %vm392 = vcmp.gt.f32.partialorder %v388, 0.0
      %vm393 = vcmp.gt.f32.partialorder %v389, 0.0
      %vm394 = vcmp.gt.f32.partialorder %v390, 0.0
      %v395 = vmul.f32 %v387, 0.2
      %v396 = vmul.f32 %v388, 0.2
      %v397 = vmul.f32 %v389, 0.2
      %v398 = vmul.f32 %v390, 0.2
      %v399 = vsel %vm391, %v387, %v395
      %v400 = vsel %vm392, %v388, %v396
      %v401 = vsel %vm393, %v389, %v397
      %v402 = vsel %vm394, %v390, %v398
      %v403 = vld [vmem:[%s269] sm:$0xff]
      %v404 = vld [vmem:[%s269 + $0x8] sm:$0xff]
      %v405 = vld [vmem:[%s269 + $0x10] sm:$0xff]
      %v406 = vld [vmem:[%s269 + $0x18] sm:$0xff]
      %vm407 = vcmp.gt.f32.partialorder %v403, 0.0
      %vm408 = vcmp.gt.f32.partialorder %v404, 0.0
      %vm409 = vcmp.gt.f32.partialorder %v405, 0.0
      %vm410 = vcmp.gt.f32.partialorder %v406, 0.0
      %v411 = vsel %vm407, %v399, -1e+30
      %v412 = vsel %vm408, %v400, -1e+30
      %v413 = vsel %vm409, %v401, -1e+30
      %v414 = vsel %vm410, %v402, -1e+30
      %vm415 = vcmask 785408
      %v416 = vsel %vm415, %v411, -inf
      %417 = vmax.xlane.f32.xlu0 %v416
      %v418 = vpop.xlane.xlu0 %417
      %v419 = vsel %vm415, %v412, -inf
      %420 = vmax.xlane.f32.xlu0 %v419
      %v421 = vpop.xlane.xlu0 %420
      %v422 = vsel %vm415, %v413, -inf
      %423 = vmax.xlane.f32.xlu0 %v422
      %v424 = vpop.xlane.xlu0 %423
      %v425 = vsel %vm415, %v414, -inf
      %426 = vmax.xlane.f32.xlu0 %v425
      %v427 = vpop.xlane.xlu0 %426
      %v428 = vsub.f32 %v411, %v418
      %v429 = vsub.f32 %v412, %v421
      %v430 = vsub.f32 %v413, %v424
      %v431 = vsub.f32 %v414, %v427
      %v432 = vmul.f32 %v428, 1.442695
      %v433 = vpow.pop %v432
      %v434 = vmul.f32 %v429, 1.442695
      %v435 = vpow.pop %v434
      %v436 = vmul.f32 %v430, 1.442695
      %v437 = vpow.pop %v436
      %v438 = vmul.f32 %v431, 1.442695
      %v439 = vpow.pop %v438
      %v440 = vsel %vm407, %v433, 0.0
      %v441 = vsel %vm408, %v435, 0.0
      %v442 = vsel %vm409, %v437, 0.0
      %v443 = vsel %vm410, %v439, 0.0
      %v444 = vsel %vm415, %v440, 0.0
      %445 = vadd.xlane.f32.xlu0 %v444
      %v446 = vpop.xlane.xlu0 %445
      %v447 = vsel %vm415, %v441, 0.0
      %448 = vadd.xlane.f32.xlu0 %v447
      %v449 = vpop.xlane.xlu0 %448
      %v450 = vsel %vm415, %v442, 0.0
      %451 = vadd.xlane.f32.xlu0 %v450
      %v452 = vpop.xlane.xlu0 %451
      %v453 = vsel %vm415, %v443, 0.0
      %454 = vadd.xlane.f32.xlu0 %v453
      %v455 = vpop.xlane.xlu0 %454
      %v456 = vrcp.pop %v446
      %v457 = vmul.f32 %v440, %v456
      %v458 = vrcp.pop %v449
      %v459 = vmul.f32 %v441, %v458
      %v460 = vrcp.pop %v452
      %v461 = vmul.f32 %v442, %v460
      %v462 = vrcp.pop %v455
      %v463 = vmul.f32 %v443, %v462
      %v464 = vld [vmem:[%s5] sm:$0x1]
      %v466 = vlaneseq
      %v467 = vshrl.u32 %v466, 7
      %v468 = vsub.s32 0, %v467
      %v469 = vrot.slane %v464, %v468
      %v472 = vsel %vm415, %v457, 0
      %v475 = vsel %vm415, %v459, 0
      %v478 = vsel %vm415, %v461, 0
      %v481 = vsel %vm415, %v463, 0
      %483 = vmatprep.subr.mxu0 0.0
      %484 = vmatpush1.msra.mxu0 0.0
      %485 = vmatprep.subr.mxu0 0.0
      %486 = vmatpush1.msra.mxu0 0.0
      %487 = vmatprep.subr.mxu0 0.0
      %488 = vmatpush1.msra.mxu0 0.0
      %489 = vmatprep.subr.mxu0 0.0
      %490 = vmatpush1.msra.mxu0 0.0
      %491 = vmatprep.subr.mxu0 0.0
      %492 = vmatpush1.msra.mxu0 %v292
      %493 = vmatprep.subr.mxu0 0.0
      %494 = vmatpush1.msra.mxu0 %v291
      %495 = vmatprep.subr.mxu0 0.0
      %496 = vmatpush1.msra.mxu0 %v290
      %497 = vmatprep.subr.mxu0 0.0
      %498 = vmatpush1.msra.mxu0 %v289
      %499 = vmatprep.subr.mxu0 0.0
      %500 = vmatpush1.msra.mxu0 %v288
      %501 = vmatprep.subr.mxu0 0.0
      %502 = vmatpush1.msra.mxu0 %v287
      %503 = vmatprep.subr.mxu0 0.0
      %504 = vmatpush1.msra.mxu0 %v286
      %505 = vmatprep.subr.mxu0 0.0
      %506 = vmatpush1.msra.mxu0 %v285
      %507 = vmatprep.subr.mxu0 0.0
      %508 = vmatpush1.msra.mxu0 %v284
      %509 = vmatprep.subr.mxu0 0.0
      %510 = vmatpush1.msra.mxu0 %v283
      %511 = vmatprep.subr.mxu0 0.0
      %512 = vmatpush1.msra.mxu0 %v282
      %513 = vmatprep.subr.mxu0 0.0
      %514 = vmatpush1.msra.mxu0 %v281
      %515 = vmatprep.subr.mxu0 0.0
      %516 = vmatpush2.msra.mxu0 0.0
      %517 = vmatprep.subr.mxu0 0.0
      %518 = vmatpush2.msra.mxu0 0.0
      %519 = vmatprep.subr.mxu0 0.0
      %520 = vmatpush2.msra.mxu0 0.0
      %521 = vmatprep.subr.mxu0 0.0
      %522 = vmatpush2.msra.mxu0 0.0
      %523 = vmatprep.subr.mxu0 0.0
      %524 = vmatpush2.msra.mxu0 0.0
      %525 = vmatprep.subr.mxu0 0.0
      %526 = vmatpush2.msra.mxu0 0.0
      %527 = vmatprep.subr.mxu0 0.0
      %528 = vmatpush2.msra.mxu0 0.0
      %529 = vmatprep.subr.mxu0 0.0
      %530 = vmatpush2.msra.mxu0 0.0
      %531 = vmatprep.subr.mxu0 0.0
      %532 = vmatpush2.msra.mxu0 0.0
      %533 = vmatprep.subr.mxu0 0.0
      %534 = vmatpush2.msra.mxu0 0.0
      %535 = vmatprep.subr.mxu0 0.0
      %536 = vmatpush2.msra.mxu0 0.0
      %537 = vmatprep.subr.mxu0 0.0
      %538 = vmatpush2.msra.mxu0 0.0
      %539 = vmatprep.subr.mxu0 0.0
      %540 = vmatpush2.msra.mxu0 0.0
      %541 = vmatprep.subr.mxu0 0.0
      %542 = vmatpush2.msra.mxu0 0.0
      %543 = vmatprep.subr.mxu0 0.0
      %544 = vmatpush2.msra.mxu0 0.0
      %545 = vmatprep.subr.mxu0 0.0
      %546 = vmatpush2.msra.mxu0 0.0
      %547 = vmatprep.mubr.f32.mxu0 0.0
      %548 = vmatmul.mubr.f32.gmra.mxu0 %v472
      %v549 = vpop.f32.mrf.mxu0
      %v550 = vadd.f32 %v469, %v549
      %v551 = vpop.f32.mrf.mxu0
      %552 = vmatprep.mubr.f32.mxu0 0.0
      %553 = vmatmul.mubr.f32.gmra.mxu0 %v475
      %v554 = vpop.f32.mrf.mxu0
      %v555 = vadd.f32 %v469, %v554
      %v556 = vpop.f32.mrf.mxu0
      %557 = vmatprep.mubr.f32.mxu0 0.0
      %558 = vmatmul.mubr.f32.gmra.mxu0 %v478
      %v559 = vpop.f32.mrf.mxu0
      %v560 = vadd.f32 %v469, %v559
      %v561 = vpop.f32.mrf.mxu0
      %562 = vmatprep.mubr.f32.mxu0 0.0
      %563 = vmatmul.mubr.f32.gmra.mxu0 %v481
      %v564 = vpop.f32.mrf.mxu0
      %v565 = vadd.f32 %v469, %v564
      %v566 = vpop.f32.mrf.mxu0
      %567 = vdwg.mxu0
      %v568 = vmax.f32 %v550, 0.0
      %v569 = vmax.f32 %v555, 0.0
      %v570 = vmax.f32 %v560, 0.0
      %v571 = vmax.f32 %v565, 0.0
      %572 = vst [vmem:[%s275] sm:$0xff] %v568
      %573 = vst [vmem:[%s275 + $0x8] sm:$0xff] %v569
      %574 = vst [vmem:[%s275 + $0x10] sm:$0xff] %v570
      %575 = vst [vmem:[%s275 + $0x18] sm:$0xff] %v571
      %s576 = smul.u32 4, %s17
      %p577 = scmp.lt.s32.totalorder %s576, 11
      %s578 = scalar_select %p577, %s576, 11
      %s579 = smul.addr %s578, 8
      %s580 = scalar_lea.vmem %s6, %s579
      // Predicated region
      $region45: #{gat_forward.7} parent=43 // pred_check
        %p581 = pneg %p171
      $region46: #{gat_forward.7} parent=43 // pred_check_branch
        %583 = sbr.rel (%p581) target = $region48
      $region47: #{gat_forward.7} parent=43 // pred_region
        %s584 = smul.u32 4, %s17
      $region48: #{gat_forward.7} parent=43 // pred_fallthru
        _
    $region44: #{gat_forward.7} parent=5 // pred_fallthru
      _
    %p585 = scmp.le.s32.totalorder 2, %s12
    // Predicated region
    $region49: #{gat_forward.7} parent=5 // pred_check
      %p586 = pneg %p585
    $region50: #{gat_forward.7} parent=5 // pred_check_branch
      %588 = sbr.rel (%p586) target = $region52
    $region51: #{gat_forward.7} parent=5 // pred_region
      %s589 = ssub.s32 %s12, 2
      // Predicated region
      $region53: #{gat_forward.7} parent=51 // pred_check
        %p590 = pneg %p177
      $region54: #{gat_forward.7} parent=51 // pred_check_branch
        %592 = sbr.rel (%p590) target = $region56
      $region55: #{gat_forward.7} parent=51 // pred_region
        %s593 = smul.u32 4, %s18
        %p594 = scmp.lt.s32.totalorder %s593, 11
        %s595 = scalar_select %p594, %s593, 11
        %s596 = smul.addr %s595, 8
        %s597 = scalar_lea.vmem %s6, %s596
      $region56: #{gat_forward.7} parent=51 // pred_fallthru
        _
    $region52: #{gat_forward.7} parent=5 // pred_fallthru
      _
  $region6: #{gat_forward.7} parent=0 // loop_footer
    %s16 = sadd.s32 1, %s12
  $region7: #{gat_forward.7} parent=0 // loop_footer_branch
    %11 = sbr.rel target = $region3
  $region8: #{gat_forward.7} parent=0 // loop_exit
    _

// kernel: gat_forward.6
$region0: #{gat_forward.6}
  #allocation0 [shape = 'u32[]', space=smem, size = 0x4, offset = 0x4, fixed_abs, tag = 'smem constant byte address 0x4 - core index']
  #allocation1 [shape = 'u32[144,128]{1,0:T(1,128)}', space=vmem, size = 0x12000, scoped, tag = 'internal scratch']
  %s0 = inlined_call_operand.vmem [shape: f32[96,128], index: 0, kind: input, shape index: {}]
  %s1 = inlined_call_operand.vmem [shape: f32[128,128], index: 1, kind: input, shape index: {}]
  %s2 = inlined_call_operand.vmem [shape: f32[96,128], index: 2, kind: output, shape index: {}]
  %s3 = sld [smem:[#allocation0]]
  $region41: #{gat_forward.6} parent=0
    _
  %s5 = ssub.s32 1, %s3
  %s6 = scalar_select 0, %s5, %s3
  loop: start=0, step=1, limit=5
  $region2: #{gat_forward.6} parent=0 // loop_pre_header
    _
  $region3: #{gat_forward.6} parent=0 // loop_header
    %s8 = sphi 0, %s12
    %p9 = scmp.ge.s32.totalorder %s8, 5
    %s18 = sphi 0, %s20
    %s21 = sphi 0, %s18
    %s22 = sphi 0, %s21
    %s38 = sphi 0, %s22
    %s42 = sphi 0, %s42
    %s44 = sphi 0, %s42
    %s45 = sphi 0, %s44
    %s59 = sphi 0, %s45
    %s65 = sphi 0, %s67
    %s68 = sphi 0, %s65
    %s69 = sphi 0, %s68
    %s85 = sphi 0, %s69
  $region4: #{gat_forward.6} parent=0 // loop_header_branch
    %11 = sbr.rel (%p9) target = $region8
  $region5: #{gat_forward.6} parent=0 // loop_body
    %s13 = ssub.s32 %s8, 1
    %s14 = ssub.s32 %s8, 2
    %s15 = sadd.s32 %s8, 1
    %s16 = ssub.s32 %s8, %s15
    %p17 = scmp.eq.s32.totalorder %s16, 0
    %s19 = sadd.s32 %s18, 1
    %s20 = scalar_select %p17, %s18, %s19
    %p23 = pneg %p17
    %p24 = scmp.eq.s32.totalorder %s8, 2
    %p25 = por %p23, %p24
    %p26 = scmp.ne.s32.totalorder %s18, %s21
    %p27 = scmp.eq.s32.totalorder %s8, 0
    %p28 = por %p26, %p27
    %p29 = scmp.ne.s32.totalorder %s18, %s21
    %p30 = scmp.eq.s32.totalorder %s13, 2
    %p31 = por %p29, %p30
    %p32 = scmp.ne.s32.totalorder %s21, %s22
    %p33 = scmp.eq.s32.totalorder %s13, 0
    %p34 = por %p32, %p33
    %p35 = scmp.ne.s32.totalorder %s21, %s22
    %p36 = scmp.eq.s32.totalorder %s14, 2
    %p37 = por %p35, %p36
    %p39 = scmp.ne.s32.totalorder %s22, %s38
    %p40 = scmp.eq.s32.totalorder %s14, 0
    %p41 = por %p39, %p40
    %s43 = sadd.s32 %s42, 1
    %p46 = scmp.eq.s32.totalorder %s8, 2
    %p47 = scmp.ne.s32.totalorder %s42, %s44
    %p48 = scmp.eq.s32.totalorder %s8, 0
    %p49 = por %p47, %p48
    %p50 = scmp.ne.s32.totalorder %s42, %s44
    %p51 = scmp.eq.s32.totalorder %s13, 2
    %p52 = por %p50, %p51
    %p53 = scmp.ne.s32.totalorder %s44, %s45
    %p54 = scmp.eq.s32.totalorder %s13, 0
    %p55 = por %p53, %p54
    %p56 = scmp.ne.s32.totalorder %s44, %s45
    %p57 = scmp.eq.s32.totalorder %s14, 2
    %p58 = por %p56, %p57
    %p60 = scmp.ne.s32.totalorder %s45, %s59
    %p61 = scmp.eq.s32.totalorder %s14, 0
    %p62 = por %p60, %p61
    %s63 = ssub.s32 %s8, %s15
    %p64 = scmp.eq.s32.totalorder %s63, 0
    %s66 = sadd.s32 %s65, 1
    %s67 = scalar_select %p64, %s65, %s66
    %p70 = pneg %p64
    %p71 = scmp.eq.s32.totalorder %s8, 2
    %p72 = por %p70, %p71
    %p73 = scmp.ne.s32.totalorder %s65, %s68
    %p74 = scmp.eq.s32.totalorder %s8, 0
    %p75 = por %p73, %p74
    %p76 = scmp.ne.s32.totalorder %s65, %s68
    %p77 = scmp.eq.s32.totalorder %s13, 2
    %p78 = por %p76, %p77
    %p79 = scmp.ne.s32.totalorder %s68, %s69
    %p80 = scmp.eq.s32.totalorder %s13, 0
    %p81 = por %p79, %p80
    %p82 = scmp.ne.s32.totalorder %s68, %s69
    %p83 = scmp.eq.s32.totalorder %s14, 2
    %p84 = por %p82, %p83
    %p86 = scmp.ne.s32.totalorder %s69, %s85
    %p87 = scmp.eq.s32.totalorder %s14, 0
    %p88 = por %p86, %p87
    %p89 = scmp.le.s32.totalorder 1, %s8
    %p90 = scmp.lt.s32.totalorder %s8, 4
    %p91 = pnand %p89, %p90
    %p92 = pneg %p91
    // Predicated region
    $region9: #{gat_forward.6} parent=5 // pred_check
      _
    $region10: #{gat_forward.6} parent=5 // pred_check_branch
      %94 = sbr.rel (%p91) target = $region12
    $region11: #{gat_forward.6} parent=5 // pred_region
      %s95 = ssub.s32 %s8, 1
      // Predicated region
      $region13: #{gat_forward.6} parent=11 // pred_check
        %p96 = pneg %p55
      $region14: #{gat_forward.6} parent=11 // pred_check_branch
        %98 = sbr.rel (%p96) target = $region16
      $region15: #{gat_forward.6} parent=11 // pred_region
        _
      $region16: #{gat_forward.6} parent=11 // pred_fallthru
        _
    $region12: #{gat_forward.6} parent=5 // pred_fallthru
      _
    %p99 = scmp.lt.s32.totalorder %s8, 3
    // Predicated region
    $region17: #{gat_forward.6} parent=5 // pred_check
      %p100 = pneg %p99
    $region18: #{gat_forward.6} parent=5 // pred_check_branch
      %102 = sbr.rel (%p100) target = $region20
    $region19: #{gat_forward.6} parent=5 // pred_region
      // Predicated region
      $region21: #{gat_forward.6} parent=19 // pred_check
        %p103 = pneg %p28
      $region22: #{gat_forward.6} parent=19 // pred_check_branch
        %105 = sbr.rel (%p103) target = $region24
      $region23: #{gat_forward.6} parent=19 // pred_region
        %s106 = smul.u32 4, %s8
        %p107 = scmp.lt.s32.totalorder %s106, 11
        %s108 = scalar_select %p107, %s106, 11
        %s109 = smul.addr %s108, 8
        %s110 = scalar_lea.vmem %s0, %s109
        %s111 = smul.u32 4, %s8
      $region24: #{gat_forward.6} parent=19 // pred_fallthru
        _
    $region20: #{gat_forward.6} parent=5 // pred_fallthru
      _
    %p112 = scmp.le.s32.totalorder 1, %s8
    %p113 = scmp.lt.s32.totalorder %s8, 4
    %p114 = pnand %p112, %p113
    %p115 = pneg %p114
    // Predicated region
    $region25: #{gat_forward.6} parent=5 // pred_check
      _
    $region26: #{gat_forward.6} parent=5 // pred_check_branch
      %117 = sbr.rel (%p114) target = $region28
    $region27: #{gat_forward.6} parent=5 // pred_region
      %s118 = ssub.s32 %s8, 1
      %s119 = smul.u32 4, %s13
      %p120 = scmp.lt.s32.totalorder %s119, 11
      %s121 = scalar_select %p120, %s119, 11
      %s122 = smul.addr %s121, 8
      %s123 = scalar_lea.vmem %s0, %s122
      %p124 = pneg %p34
      %p125 = pneg %p31
      %p126 = pneg %p55
      %p127 = pneg %p52
      %p128 = pneg %p81
      %p129 = pneg %p78
      %s130 = smul.u32 4, %s13
      %p131 = scmp.lt.s32.totalorder %s130, 11
      %s132 = scalar_select %p131, %s130, 11
      %s133 = smul.addr %s132, 8
      %s134 = scalar_lea.vmem %s2, %s133
      %s135 = smul.u32 4, %s13
      %p136 = scmp.lt.s32.totalorder %s135, 11
      %s137 = scalar_select %p136, %s135, 11
      %s138 = smul.addr %s137, 8
      %s139 = scalar_lea.vmem %s0, %s138
      %s140 = smul.u32 4, %s13
      %s141 = smul.u32 4, %s13
      %p142 = scmp.lt.s32.totalorder %s141, 11
      %s143 = scalar_select %p142, %s141, 11
      %s144 = smul.addr %s143, 8
      %s145 = scalar_lea.vmem %s2, %s144
      %s146 = smul.u32 4, %s13
      %v147 = vld [vmem:[%s139] sm:$0xff]
      %v148 = vld [vmem:[%s139 + $0x8] sm:$0xff]
      %v149 = vld [vmem:[%s139 + $0x10] sm:$0xff]
      %v150 = vld [vmem:[%s139 + $0x18] sm:$0xff]
      %v151 = vld [vmem:[%s1] sm:$0xff]
      %v152 = vld [vmem:[%s1 + $0x8] sm:$0xff]
      %v153 = vld [vmem:[%s1 + $0x10] sm:$0xff]
      %v154 = vld [vmem:[%s1 + $0x18] sm:$0xff]
      %v155 = vld [vmem:[%s1 + $0x20] sm:$0xff]
      %v156 = vld [vmem:[%s1 + $0x28] sm:$0xff]
      %v157 = vld [vmem:[%s1 + $0x30] sm:$0xff]
      %v158 = vld [vmem:[%s1 + $0x38] sm:$0xff]
      %v159 = vld [vmem:[%s1 + $0x40] sm:$0xff]
      %v160 = vld [vmem:[%s1 + $0x48] sm:$0xff]
      %v161 = vld [vmem:[%s1 + $0x50] sm:$0xff]
      %v162 = vld [vmem:[%s1 + $0x58] sm:$0xff]
      %v163 = vld [vmem:[%s1 + $0x60] sm:$0xff]
      %v164 = vld [vmem:[%s1 + $0x68] sm:$0xff]
      %v165 = vld [vmem:[%s1 + $0x70] sm:$0xff]
      %v166 = vld [vmem:[%s1 + $0x78] sm:$0xff]
      %167 = vmatprep.subr.mxu0 0.0
      %168 = vmatpush1.msra.mxu0 %v166
      %169 = vmatprep.subr.mxu0 0.0
      %170 = vmatpush1.msra.mxu0 %v165
      %171 = vmatprep.subr.mxu0 0.0
      %172 = vmatpush1.msra.mxu0 %v164
      %173 = vmatprep.subr.mxu0 0.0
      %174 = vmatpush1.msra.mxu0 %v163
      %175 = vmatprep.subr.mxu0 0.0
      %176 = vmatpush1.msra.mxu0 %v162
      %177 = vmatprep.subr.mxu0 0.0
      %178 = vmatpush1.msra.mxu0 %v161
      %179 = vmatprep.subr.mxu0 0.0
      %180 = vmatpush1.msra.mxu0 %v160
      %181 = vmatprep.subr.mxu0 0.0
      %182 = vmatpush1.msra.mxu0 %v159
      %183 = vmatprep.subr.mxu0 0.0
      %184 = vmatpush1.msra.mxu0 %v158
      %185 = vmatprep.subr.mxu0 0.0
      %186 = vmatpush1.msra.mxu0 %v157
      %187 = vmatprep.subr.mxu0 0.0
      %188 = vmatpush1.msra.mxu0 %v156
      %189 = vmatprep.subr.mxu0 0.0
      %190 = vmatpush1.msra.mxu0 %v155
      %191 = vmatprep.subr.mxu0 0.0
      %192 = vmatpush1.msra.mxu0 %v154
      %193 = vmatprep.subr.mxu0 0.0
      %194 = vmatpush1.msra.mxu0 %v153
      %195 = vmatprep.subr.mxu0 0.0
      %196 = vmatpush1.msra.mxu0 %v152
      %197 = vmatprep.subr.mxu0 0.0
      %198 = vmatpush1.msra.mxu0 %v151
      %199 = vmatprep.subr.mxu0 0.0
      %200 = vmatpush2.msra.mxu0 0.0
      %201 = vmatprep.subr.mxu0 0.0
      %202 = vmatpush2.msra.mxu0 0.0
      %203 = vmatprep.subr.mxu0 0.0
      %204 = vmatpush2.msra.mxu0 0.0
      %205 = vmatprep.subr.mxu0 0.0
      %206 = vmatpush2.msra.mxu0 0.0
      %207 = vmatprep.subr.mxu0 0.0
      %208 = vmatpush2.msra.mxu0 0.0
      %209 = vmatprep.subr.mxu0 0.0
      %210 = vmatpush2.msra.mxu0 0.0
      %211 = vmatprep.subr.mxu0 0.0
      %212 = vmatpush2.msra.mxu0 0.0
      %213 = vmatprep.subr.mxu0 0.0
      %214 = vmatpush2.msra.mxu0 0.0
      %215 = vmatprep.subr.mxu0 0.0
      %216 = vmatpush2.msra.mxu0 0.0
      %217 = vmatprep.subr.mxu0 0.0
      %218 = vmatpush2.msra.mxu0 0.0
      %219 = vmatprep.subr.mxu0 0.0
      %220 = vmatpush2.msra.mxu0 0.0
      %221 = vmatprep.subr.mxu0 0.0
      %222 = vmatpush2.msra.mxu0 0.0
      %223 = vmatprep.subr.mxu0 0.0
      %224 = vmatpush2.msra.mxu0 0.0
      %225 = vmatprep.subr.mxu0 0.0
      %226 = vmatpush2.msra.mxu0 0.0
      %227 = vmatprep.subr.mxu0 0.0
      %228 = vmatpush2.msra.mxu0 0.0
      %229 = vmatprep.subr.mxu0 0.0
      %230 = vmatpush2.msra.mxu0 0.0
      %231 = vmatprep.mubr.f32.mxu0 0.0
      %232 = vmatmul.mubr.f32.gmra.mxu0 %v147
      %v233 = vpop.f32.mrf.mxu0
      %v234 = vadd.f32 0.0, %v233
      %v235 = vpop.f32.mrf.mxu0
      %236 = vmatprep.mubr.f32.mxu0 0.0
      %237 = vmatmul.mubr.f32.gmra.mxu0 %v148
      %v238 = vpop.f32.mrf.mxu0
      %v239 = vadd.f32 0.0, %v238
      %v240 = vpop.f32.mrf.mxu0
      %241 = vmatprep.mubr.f32.mxu0 0.0
      %242 = vmatmul.mubr.f32.gmra.mxu0 %v149
      %v243 = vpop.f32.mrf.mxu0
      %v244 = vadd.f32 0.0, %v243
      %v245 = vpop.f32.mrf.mxu0
      %246 = vmatprep.mubr.f32.mxu0 0.0
      %247 = vmatmul.mubr.f32.gmra.mxu0 %v150
      %v248 = vpop.f32.mrf.mxu0
      %v249 = vadd.f32 0.0, %v248
      %v250 = vpop.f32.mrf.mxu0
      %251 = vdwg.mxu0
      %252 = vst [vmem:[%s145] sm:$0xff] %v234
      %253 = vst [vmem:[%s145 + $0x8] sm:$0xff] %v239
      %254 = vst [vmem:[%s145 + $0x10] sm:$0xff] %v244
      %255 = vst [vmem:[%s145 + $0x18] sm:$0xff] %v249
      %s256 = smul.u32 4, %s13
      %p257 = scmp.lt.s32.totalorder %s256, 11
      %s258 = scalar_select %p257, %s256, 11
      %s259 = smul.addr %s258, 8
      %s260 = scalar_lea.vmem %s2, %s259
      // Predicated region
      $region29: #{gat_forward.6} parent=27 // pred_check
        %p261 = pneg %p78
      $region30: #{gat_forward.6} parent=27 // pred_check_branch
        %263 = sbr.rel (%p261) target = $region32
      $region31: #{gat_forward.6} parent=27 // pred_region
        %s264 = smul.u32 4, %s13
      $region32: #{gat_forward.6} parent=27 // pred_fallthru
        _
    $region28: #{gat_forward.6} parent=5 // pred_fallthru
      _
    %p265 = scmp.le.s32.totalorder 2, %s8
    // Predicated region
    $region33: #{gat_forward.6} parent=5 // pred_check
      %p266 = pneg %p265
    $region34: #{gat_forward.6} parent=5 // pred_check_branch
      %268 = sbr.rel (%p266) target = $region36
    $region35: #{gat_forward.6} parent=5 // pred_region
      %s269 = ssub.s32 %s8, 2
      // Predicated region
      $region37: #{gat_forward.6} parent=35 // pred_check
        %p270 = pneg %p84
      $region38: #{gat_forward.6} parent=35 // pred_check_branch
        %272 = sbr.rel (%p270) target = $region40
      $region39: #{gat_forward.6} parent=35 // pred_region
        %s273 = smul.u32 4, %s14
        %p274 = scmp.lt.s32.totalorder %s273, 11
        %s275 = scalar_select %p274, %s273, 11
        %s276 = smul.addr %s275, 8
        %s277 = scalar_lea.vmem %s2, %s276
      $region40: #{gat_forward.6} parent=35 // pred_fallthru
        _
    $region36: #{gat_forward.6} parent=5 // pred_fallthru
      _
  $region6: #{gat_forward.6} parent=0 // loop_footer
    %s12 = sadd.s32 1, %s8
  $region7: #{gat_forward.6} parent=0 // loop_footer_branch
    %7 = sbr.rel target = $region3
  $region8: #{gat_forward.6} parent=0 // loop_exit
    _

// kernel: gat_forward.11
$region0: #{gat_forward.11}
  #allocation0 [shape = 'u32[]', space=smem, size = 0x4, offset = 0x4, fixed_abs, tag = 'smem constant byte address 0x4 - core index']
  #allocation1 [shape = 'u32[144,128]{1,0:T(1,128)}', space=vmem, size = 0x12000, scoped, tag = 'internal scratch']
  %s0 = inlined_call_operand.vmem [shape: f32[96,128], index: 0, kind: input, shape index: {}, may-alias: {0,1}]
  %s1 = inlined_call_operand.vmem [shape: f32[96,128], index: 1, kind: input, shape index: {}, may-alias: {0,1}]
  %s2 = inlined_call_operand.vmem [shape: f32[96,96], index: 2, kind: input, shape index: {}]
  %s3 = inlined_call_operand.vmem [shape: f32[1,128], index: 3, kind: input, shape index: {}]
  %s4 = inlined_call_operand.vmem [shape: f32[1,128], index: 4, kind: input, shape index: {}]
  %s5 = inlined_call_operand.vmem [shape: f32[1,128], index: 5, kind: input, shape index: {}]
  %s6 = inlined_call_operand.vmem [shape: f32[96,128], index: 6, kind: output, shape index: {}]
  %s7 = sld [smem:[#allocation0]]
  $region57: #{gat_forward.11} parent=0
    _
  %s9 = ssub.s32 1, %s7
  %s10 = scalar_select 0, %s9, %s7
  loop: start=0, step=1, limit=5
  $region2: #{gat_forward.11} parent=0 // loop_pre_header
    _
  $region3: #{gat_forward.11} parent=0 // loop_header
    %s12 = sphi 0, %s16
    %p13 = scmp.ge.s32.totalorder %s12, 5
    %s22 = sphi 0, %s24
    %s25 = sphi 0, %s22
    %s26 = sphi 0, %s25
    %s42 = sphi 0, %s26
    %s46 = sphi 0, %s46
    %s48 = sphi 0, %s46
    %s49 = sphi 0, %s48
    %s63 = sphi 0, %s49
    %s69 = sphi 0, %s71
    %s72 = sphi 0, %s69
    %s73 = sphi 0, %s72
    %s89 = sphi 0, %s73
    %s93 = sphi 0, %s93
    %s95 = sphi 0, %s93
    %s96 = sphi 0, %s95
    %s110 = sphi 0, %s96
    %s114 = sphi 0, %s114
    %s116 = sphi 0, %s114
    %s117 = sphi 0, %s116
    %s131 = sphi 0, %s117
    %s135 = sphi 0, %s135
    %s137 = sphi 0, %s135
    %s138 = sphi 0, %s137
    %s152 = sphi 0, %s138
    %s158 = sphi 0, %s160
    %s161 = sphi 0, %s158
    %s162 = sphi 0, %s161
    %s178 = sphi 0, %s162
  $region4: #{gat_forward.11} parent=0 // loop_header_branch
    %15 = sbr.rel (%p13) target = $region8
  $region5: #{gat_forward.11} parent=0 // loop_body
    %s17 = ssub.s32 %s12, 1
    %s18 = ssub.s32 %s12, 2
    %s19 = sadd.s32 %s12, 1
    %s20 = ssub.s32 %s12, %s19
    %p21 = scmp.eq.s32.totalorder %s20, 0
    %s23 = sadd.s32 %s22, 1
    %s24 = scalar_select %p21, %s22, %s23
    %p27 = pneg %p21
    %p28 = scmp.eq.s32.totalorder %s12, 2
    %p29 = por %p27, %p28
    %p30 = scmp.ne.s32.totalorder %s22, %s25
    %p31 = scmp.eq.s32.totalorder %s12, 0
    %p32 = por %p30, %p31
    %p33 = scmp.ne.s32.totalorder %s22, %s25
    %p34 = scmp.eq.s32.totalorder %s17, 2
    %p35 = por %p33, %p34
    %p36 = scmp.ne.s32.totalorder %s25, %s26
    %p37 = scmp.eq.s32.totalorder %s17, 0
    %p38 = por %p36, %p37
    %p39 = scmp.ne.s32.totalorder %s25, %s26
    %p40 = scmp.eq.s32.totalorder %s18, 2
    %p41 = por %p39, %p40
    %p43 = scmp.ne.s32.totalorder %s26, %s42
    %p44 = scmp.eq.s32.totalorder %s18, 0
    %p45 = por %p43, %p44
    %s47 = sadd.s32 %s46, 1
    %p50 = scmp.eq.s32.totalorder %s12, 2
    %p51 = scmp.ne.s32.totalorder %s46, %s48
    %p52 = scmp.eq.s32.totalorder %s12, 0
    %p53 = por %p51, %p52
    %p54 = scmp.ne.s32.totalorder %s46, %s48
    %p55 = scmp.eq.s32.totalorder %s17, 2
    %p56 = por %p54, %p55
    %p57 = scmp.ne.s32.totalorder %s48, %s49
    %p58 = scmp.eq.s32.totalorder %s17, 0
    %p59 = por %p57, %p58
    %p60 = scmp.ne.s32.totalorder %s48, %s49
    %p61 = scmp.eq.s32.totalorder %s18, 2
    %p62 = por %p60, %p61
    %p64 = scmp.ne.s32.totalorder %s49, %s63
    %p65 = scmp.eq.s32.totalorder %s18, 0
    %p66 = por %p64, %p65
    %s67 = ssub.s32 %s12, %s19
    %p68 = scmp.eq.s32.totalorder %s67, 0
    %s70 = sadd.s32 %s69, 1
    %s71 = scalar_select %p68, %s69, %s70
    %p74 = pneg %p68
    %p75 = scmp.eq.s32.totalorder %s12, 2
    %p76 = por %p74, %p75
    %p77 = scmp.ne.s32.totalorder %s69, %s72
    %p78 = scmp.eq.s32.totalorder %s12, 0
    %p79 = por %p77, %p78
    %p80 = scmp.ne.s32.totalorder %s69, %s72
    %p81 = scmp.eq.s32.totalorder %s17, 2
    %p82 = por %p80, %p81
    %p83 = scmp.ne.s32.totalorder %s72, %s73
    %p84 = scmp.eq.s32.totalorder %s17, 0
    %p85 = por %p83, %p84
    %p86 = scmp.ne.s32.totalorder %s72, %s73
    %p87 = scmp.eq.s32.totalorder %s18, 2
    %p88 = por %p86, %p87
    %p90 = scmp.ne.s32.totalorder %s73, %s89
    %p91 = scmp.eq.s32.totalorder %s18, 0
    %p92 = por %p90, %p91
    %s94 = sadd.s32 %s93, 1
    %p97 = scmp.eq.s32.totalorder %s12, 2
    %p98 = scmp.ne.s32.totalorder %s93, %s95
    %p99 = scmp.eq.s32.totalorder %s12, 0
    %p100 = por %p98, %p99
    %p101 = scmp.ne.s32.totalorder %s93, %s95
    %p102 = scmp.eq.s32.totalorder %s17, 2
    %p103 = por %p101, %p102
    %p104 = scmp.ne.s32.totalorder %s95, %s96
    %p105 = scmp.eq.s32.totalorder %s17, 0
    %p106 = por %p104, %p105
    %p107 = scmp.ne.s32.totalorder %s95, %s96
    %p108 = scmp.eq.s32.totalorder %s18, 2
    %p109 = por %p107, %p108
    %p111 = scmp.ne.s32.totalorder %s96, %s110
    %p112 = scmp.eq.s32.totalorder %s18, 0
    %p113 = por %p111, %p112
    %s115 = sadd.s32 %s114, 1
    %p118 = scmp.eq.s32.totalorder %s12, 2
    %p119 = scmp.ne.s32.totalorder %s114, %s116
    %p120 = scmp.eq.s32.totalorder %s12, 0
    %p121 = por %p119, %p120
    %p122 = scmp.ne.s32.totalorder %s114, %s116
    %p123 = scmp.eq.s32.totalorder %s17, 2
    %p124 = por %p122, %p123
    %p125 = scmp.ne.s32.totalorder %s116, %s117
    %p126 = scmp.eq.s32.totalorder %s17, 0
    %p127 = por %p125, %p126
    %p128 = scmp.ne.s32.totalorder %s116, %s117
    %p129 = scmp.eq.s32.totalorder %s18, 2
    %p130 = por %p128, %p129
    %p132 = scmp.ne.s32.totalorder %s117, %s131
    %p133 = scmp.eq.s32.totalorder %s18, 0
    %p134 = por %p132, %p133
    %s136 = sadd.s32 %s135, 1
    %p139 = scmp.eq.s32.totalorder %s12, 2
    %p140 = scmp.ne.s32.totalorder %s135, %s137
    %p141 = scmp.eq.s32.totalorder %s12, 0
    %p142 = por %p140, %p141
    %p143 = scmp.ne.s32.totalorder %s135, %s137
    %p144 = scmp.eq.s32.totalorder %s17, 2
    %p145 = por %p143, %p144
    %p146 = scmp.ne.s32.totalorder %s137, %s138
    %p147 = scmp.eq.s32.totalorder %s17, 0
    %p148 = por %p146, %p147
    %p149 = scmp.ne.s32.totalorder %s137, %s138
    %p150 = scmp.eq.s32.totalorder %s18, 2
    %p151 = por %p149, %p150
    %p153 = scmp.ne.s32.totalorder %s138, %s152
    %p154 = scmp.eq.s32.totalorder %s18, 0
    %p155 = por %p153, %p154
    %s156 = ssub.s32 %s12, %s19
    %p157 = scmp.eq.s32.totalorder %s156, 0
    %s159 = sadd.s32 %s158, 1
    %s160 = scalar_select %p157, %s158, %s159
    %p163 = pneg %p157
    %p164 = scmp.eq.s32.totalorder %s12, 2
    %p165 = por %p163, %p164
    %p166 = scmp.ne.s32.totalorder %s158, %s161
    %p167 = scmp.eq.s32.totalorder %s12, 0
    %p168 = por %p166, %p167
    %p169 = scmp.ne.s32.totalorder %s158, %s161
    %p170 = scmp.eq.s32.totalorder %s17, 2
    %p171 = por %p169, %p170
    %p172 = scmp.ne.s32.totalorder %s161, %s162
    %p173 = scmp.eq.s32.totalorder %s17, 0
    %p174 = por %p172, %p173
    %p175 = scmp.ne.s32.totalorder %s161, %s162
    %p176 = scmp.eq.s32.totalorder %s18, 2
    %p177 = por %p175, %p176
    %p179 = scmp.ne.s32.totalorder %s162, %s178
    %p180 = scmp.eq.s32.totalorder %s18, 0
    %p181 = por %p179, %p180
    %p182 = scmp.le.s32.totalorder 1, %s12
    %p183 = scmp.lt.s32.totalorder %s12, 4
    %p184 = pnand %p182, %p183
    %p185 = pneg %p184
    // Predicated region
    $region9: #{gat_forward.11} parent=5 // pred_check
      _
    $region10: #{gat_forward.11} parent=5 // pred_check_branch
      %187 = sbr.rel (%p184) target = $region12
    $region11: #{gat_forward.11} parent=5 // pred_region
      %s188 = ssub.s32 %s12, 1
      // Predicated region
      $region13: #{gat_forward.11} parent=11 // pred_check
        %p189 = pneg %p59
      $region14: #{gat_forward.11} parent=11 // pred_check_branch
        %191 = sbr.rel (%p189) target = $region16
      $region15: #{gat_forward.11} parent=11 // pred_region
        _
      $region16: #{gat_forward.11} parent=11 // pred_fallthru
        _
      // Predicated region
      $region17: #{gat_forward.11} parent=11 // pred_check
        %p192 = pneg %p106
      $region18: #{gat_forward.11} parent=11 // pred_check_branch
        %194 = sbr.rel (%p192) target = $region20
      $region19: #{gat_forward.11} parent=11 // pred_region
        _
      $region20: #{gat_forward.11} parent=11 // pred_fallthru
        _
      // Predicated region
      $region21: #{gat_forward.11} parent=11 // pred_check
        %p195 = pneg %p127
      $region22: #{gat_forward.11} parent=11 // pred_check_branch
        %197 = sbr.rel (%p195) target = $region24
      $region23: #{gat_forward.11} parent=11 // pred_region
        _
      $region24: #{gat_forward.11} parent=11 // pred_fallthru
        _
      // Predicated region
      $region25: #{gat_forward.11} parent=11 // pred_check
        %p198 = pneg %p148
      $region26: #{gat_forward.11} parent=11 // pred_check_branch
        %200 = sbr.rel (%p198) target = $region28
      $region27: #{gat_forward.11} parent=11 // pred_region
        _
      $region28: #{gat_forward.11} parent=11 // pred_fallthru
        _
    $region12: #{gat_forward.11} parent=5 // pred_fallthru
      _
    %p201 = scmp.lt.s32.totalorder %s12, 3
    // Predicated region
    $region29: #{gat_forward.11} parent=5 // pred_check
      %p202 = pneg %p201
    $region30: #{gat_forward.11} parent=5 // pred_check_branch
      %204 = sbr.rel (%p202) target = $region32
    $region31: #{gat_forward.11} parent=5 // pred_region
      // Predicated region
      $region33: #{gat_forward.11} parent=31 // pred_check
        %p205 = pneg %p32
      $region34: #{gat_forward.11} parent=31 // pred_check_branch
        %207 = sbr.rel (%p205) target = $region36
      $region35: #{gat_forward.11} parent=31 // pred_region
        %s208 = smul.u32 4, %s12
        %p209 = scmp.lt.s32.totalorder %s208, 11
        %s210 = scalar_select %p209, %s208, 11
        %s211 = smul.addr %s210, 8
        %s212 = scalar_lea.vmem %s0, %s211
        %s213 = smul.u32 4, %s12
      $region36: #{gat_forward.11} parent=31 // pred_fallthru
        _
      // Predicated region
      $region37: #{gat_forward.11} parent=31 // pred_check
        %p214 = pneg %p79
      $region38: #{gat_forward.11} parent=31 // pred_check_branch
        %216 = sbr.rel (%p214) target = $region40
      $region39: #{gat_forward.11} parent=31 // pred_region
        %s217 = smul.u32 4, %s12
        %p218 = scmp.lt.s32.totalorder %s217, 11
        %s219 = scalar_select %p218, %s217, 11
        %s220 = smul.addr %s219, 8
        %s221 = scalar_lea.vmem %s2, %s220
        %s222 = smul.u32 4, %s12
      $region40: #{gat_forward.11} parent=31 // pred_fallthru
        _
    $region32: #{gat_forward.11} parent=5 // pred_fallthru
      _
    %p223 = scmp.le.s32.totalorder 1, %s12
    %p224 = scmp.lt.s32.totalorder %s12, 4
    %p225 = pnand %p223, %p224
    %p226 = pneg %p225
    // Predicated region
    $region41: #{gat_forward.11} parent=5 // pred_check
      _
    $region42: #{gat_forward.11} parent=5 // pred_check_branch
      %228 = sbr.rel (%p225) target = $region44
    $region43: #{gat_forward.11} parent=5 // pred_region
      %s229 = ssub.s32 %s12, 1
      %s230 = smul.u32 4, %s17
      %p231 = scmp.lt.s32.totalorder %s230, 11
      %s232 = scalar_select %p231, %s230, 11
      %s233 = smul.addr %s232, 8
      %s234 = scalar_lea.vmem %s0, %s233
      %p235 = pneg %p38
      %p236 = pneg %p35
      %p237 = pneg %p59
      %p238 = pneg %p56
      %s239 = smul.u32 4, %s17
      %p240 = scmp.lt.s32.totalorder %s239, 11
      %s241 = scalar_select %p240, %s239, 11
      %s242 = smul.addr %s241, 8
      %s243 = scalar_lea.vmem %s2, %s242
      %p244 = pneg %p85
      %p245 = pneg %p82
      %p246 = pneg %p106
      %p247 = pneg %p103
      %p248 = pneg %p127
      %p249 = pneg %p124
      %p250 = pneg %p148
      %p251 = pneg %p145
      %p252 = pneg %p174
      %p253 = pneg %p171
      %s254 = smul.u32 4, %s17
      %p255 = scmp.lt.s32.totalorder %s254, 11
      %s256 = scalar_select %p255, %s254, 11
      %s257 = smul.addr %s256, 8
      %s258 = scalar_lea.vmem %s6, %s257
      %s259 = smul.u32 4, %s17
      %p260 = scmp.lt.s32.totalorder %s259, 11
      %s261 = scalar_select %p260, %s259, 11
      %s262 = smul.addr %s261, 8
      %s263 = scalar_lea.vmem %s0, %s262
      %s264 = smul.u32 4, %s17
      %s265 = smul.u32 4, %s17
      %p266 = scmp.lt.s32.totalorder %s265, 11
      %s267 = scalar_select %p266, %s265, 11
      %s268 = smul.addr %s267, 8
      %s269 = scalar_lea.vmem %s2, %s268
      %s270 = smul.u32 4, %s17
      %s271 = smul.u32 4, %s17
      %p272 = scmp.lt.s32.totalorder %s271, 11
      %s273 = scalar_select %p272, %s271, 11
      %s274 = smul.addr %s273, 8
      %s275 = scalar_lea.vmem %s6, %s274
      %s276 = smul.u32 4, %s17
      %v277 = vld [vmem:[%s263] sm:$0xff]
      %v278 = vld [vmem:[%s263 + $0x8] sm:$0xff]
      %v279 = vld [vmem:[%s263 + $0x10] sm:$0xff]
      %v280 = vld [vmem:[%s263 + $0x18] sm:$0xff]
      %v281 = vld [vmem:[%s1] sm:$0xff]
      %v282 = vld [vmem:[%s1 + $0x8] sm:$0xff]
      %v283 = vld [vmem:[%s1 + $0x10] sm:$0xff]
      %v284 = vld [vmem:[%s1 + $0x18] sm:$0xff]
      %v285 = vld [vmem:[%s1 + $0x20] sm:$0xff]
      %v286 = vld [vmem:[%s1 + $0x28] sm:$0xff]
      %v287 = vld [vmem:[%s1 + $0x30] sm:$0xff]
      %v288 = vld [vmem:[%s1 + $0x38] sm:$0xff]
      %v289 = vld [vmem:[%s1 + $0x40] sm:$0xff]
      %v290 = vld [vmem:[%s1 + $0x48] sm:$0xff]
      %v291 = vld [vmem:[%s1 + $0x50] sm:$0xff]
      %v292 = vld [vmem:[%s1 + $0x58] sm:$0xff]
      %v293 = vld [vmem:[%s4] sm:$0x1]
      %v295 = vlaneseq
      %v296 = vshrl.u32 %v295, 7
      %v297 = vsub.s32 0, %v296
      %v298 = vrot.slane %v293, %v297
      %v300 = vmul.f32 %v277, %v298
      %v301 = vmul.f32 %v278, %v298
      %v302 = vmul.f32 %v279, %v298
      %v303 = vmul.f32 %v280, %v298
      %304 = vadd.xlane.f32.xlu0 %v300
      %v305 = vpop.xlane.xlu0 %304
      %306 = vadd.xlane.f32.xlu0 %v301
      %v307 = vpop.xlane.xlu0 %306
      %308 = vadd.xlane.f32.xlu0 %v302
      %v309 = vpop.xlane.xlu0 %308
      %310 = vadd.xlane.f32.xlu0 %v303
      %v311 = vpop.xlane.xlu0 %310
      %v312 = vld [vmem:[%s3] sm:$0x1]
      %313 = vmatprep.subr.mxu0 0.0
      %314 = vmatpush1.xpose.msra.mxu0 0.0
      %315 = vmatprep.subr.mxu0 0.0
      %316 = vmatpush1.xpose.msra.mxu0 0.0
      %317 = vmatprep.subr.mxu0 0.0
      %318 = vmatpush1.xpose.msra.mxu0 0.0
      %319 = vmatprep.subr.mxu0 0.0
      %320 = vmatpush1.xpose.msra.mxu0 0.0
      %321 = vmatprep.subr.mxu0 0.0
      %322 = vmatpush1.xpose.msra.mxu0 %v292
      %323 = vmatprep.subr.mxu0 0.0
      %324 = vmatpush1.xpose.msra.mxu0 %v291
      %325 = vmatprep.subr.mxu0 0.0
      %326 = vmatpush1.xpose.msra.mxu0 %v290
      %327 = vmatprep.subr.mxu0 0.0
      %328 = vmatpush1.xpose.msra.mxu0 %v289
      %329 = vmatprep.subr.mxu0 0.0
      %330 = vmatpush1.xpose.msra.mxu0 %v288
      %331 = vmatprep.subr.mxu0 0.0
      %332 = vmatpush1.xpose.msra.mxu0 %v287
      %333 = vmatprep.subr.mxu0 0.0
      %334 = vmatpush1.xpose.msra.mxu0 %v286
      %335 = vmatprep.subr.mxu0 0.0
      %336 = vmatpush1.xpose.msra.mxu0 %v285
      %337 = vmatprep.subr.mxu0 0.0
      %338 = vmatpush1.xpose.msra.mxu0 %v284
      %339 = vmatprep.subr.mxu0 0.0
      %340 = vmatpush1.xpose.msra.mxu0 %v283
      %341 = vmatprep.subr.mxu0 0.0
      %342 = vmatpush1.xpose.msra.mxu0 %v282
      %343 = vmatprep.subr.mxu0 0.0
      %344 = vmatpush1.xpose.msra.mxu0 %v281
      %345 = vmatprep.subr.mxu0 0.0
      %346 = vmatpush2.xpose.msra.mxu0 0.0
      %347 = vmatprep.subr.mxu0 0.0
      %348 = vmatpush2.xpose.msra.mxu0 0.0
      %349 = vmatprep.subr.mxu0 0.0
      %350 = vmatpush2.xpose.msra.mxu0 0.0
      %351 = vmatprep.subr.mxu0 0.0
      %352 = vmatpush2.xpose.msra.mxu0 0.0
      %353 = vmatprep.subr.mxu0 0.0
      %354 = vmatpush2.xpose.msra.mxu0 0.0
      %355 = vmatprep.subr.mxu0 0.0
      %356 = vmatpush2.xpose.msra.mxu0 0.0
      %357 = vmatprep.subr.mxu0 0.0
      %358 = vmatpush2.xpose.msra.mxu0 0.0
      %359 = vmatprep.subr.mxu0 0.0
      %360 = vmatpush2.xpose.msra.mxu0 0.0
      %361 = vmatprep.subr.mxu0 0.0
      %362 = vmatpush2.xpose.msra.mxu0 0.0
      %363 = vmatprep.subr.mxu0 0.0
      %364 = vmatpush2.xpose.msra.mxu0 0.0
      %365 = vmatprep.subr.mxu0 0.0
      %366 = vmatpush2.xpose.msra.mxu0 0.0
      %367 = vmatprep.subr.mxu0 0.0
      %368 = vmatpush2.xpose.msra.mxu0 0.0
      %369 = vmatprep.subr.mxu0 0.0
      %370 = vmatpush2.xpose.msra.mxu0 0.0
      %371 = vmatprep.subr.mxu0 0.0
      %372 = vmatpush2.xpose.msra.mxu0 0.0
      %373 = vmatprep.subr.mxu0 0.0
      %374 = vmatpush2.xpose.msra.mxu0 0.0
      %375 = vmatprep.subr.mxu0 0.0
      %376 = vmatpush2.xpose.msra.mxu0 0.0
      %377 = vmatprep.mubr.f32.mxu0 0.0
      %378 = vmatmul.mubr.f32.gmra.mxu0 %v312
      %v379 = vpop.f32.mrf.mxu0
      %v380 = vadd.f32 0.0, %v379
      %v381 = vpop.f32.mrf.mxu0
      %382 = vdwg.mxu0
      %v383 = vlaneseq
      %v384 = vshrl.u32 %v383, 7
      %v385 = vsub.s32 0, %v384
      %v386 = vrot.slane %v380, %v385
      %v387 = vadd.f32 %v305, %v386
      %v388 = vadd.f32 %v307, %v386
      %v389 = vadd.f32 %v309, %v386
      %v390 = vadd.f32 %v311, %v386
      %vm391 = vcmp.gt.f32.partialorder %v387, 0.0
      %vm392 = vcmp.gt.f32.partialorder %v388, 0.0
      %vm393 = vcmp.gt.f32.partialorder %v389, 0.0
      %vm394 = vcmp.gt.f32.partialorder %v390, 0.0
      %v395 = vmul.f32 %v387, 0.2
      %v396 = vmul.f32 %v388, 0.2
      %v397 = vmul.f32 %v389, 0.2
      %v398 = vmul.f32 %v390, 0.2
      %v399 = vsel %vm391, %v387, %v395
      %v400 = vsel %vm392, %v388, %v396
      %v401 = vsel %vm393, %v389, %v397
      %v402 = vsel %vm394, %v390, %v398
      %v403 = vld [vmem:[%s269] sm:$0xff]
      %v404 = vld [vmem:[%s269 + $0x8] sm:$0xff]
      %v405 = vld [vmem:[%s269 + $0x10] sm:$0xff]
      %v406 = vld [vmem:[%s269 + $0x18] sm:$0xff]
      %vm407 = vcmp.gt.f32.partialorder %v403, 0.0
      %vm408 = vcmp.gt.f32.partialorder %v404, 0.0
      %vm409 = vcmp.gt.f32.partialorder %v405, 0.0
      %vm410 = vcmp.gt.f32.partialorder %v406, 0.0
      %v411 = vsel %vm407, %v399, -1e+30
      %v412 = vsel %vm408, %v400, -1e+30
      %v413 = vsel %vm409, %v401, -1e+30
      %v414 = vsel %vm410, %v402, -1e+30
      %vm415 = vcmask 785408
      %v416 = vsel %vm415, %v411, -inf
      %417 = vmax.xlane.f32.xlu0 %v416
      %v418 = vpop.xlane.xlu0 %417
      %v419 = vsel %vm415, %v412, -inf
      %420 = vmax.xlane.f32.xlu0 %v419
      %v421 = vpop.xlane.xlu0 %420
      %v422 = vsel %vm415, %v413, -inf
      %423 = vmax.xlane.f32.xlu0 %v422
      %v424 = vpop.xlane.xlu0 %423
      %v425 = vsel %vm415, %v414, -inf
      %426 = vmax.xlane.f32.xlu0 %v425
      %v427 = vpop.xlane.xlu0 %426
      %v428 = vsub.f32 %v411, %v418
      %v429 = vsub.f32 %v412, %v421
      %v430 = vsub.f32 %v413, %v424
      %v431 = vsub.f32 %v414, %v427
      %v432 = vmul.f32 %v428, 1.442695
      %v433 = vpow.pop %v432
      %v434 = vmul.f32 %v429, 1.442695
      %v435 = vpow.pop %v434
      %v436 = vmul.f32 %v430, 1.442695
      %v437 = vpow.pop %v436
      %v438 = vmul.f32 %v431, 1.442695
      %v439 = vpow.pop %v438
      %v440 = vsel %vm407, %v433, 0.0
      %v441 = vsel %vm408, %v435, 0.0
      %v442 = vsel %vm409, %v437, 0.0
      %v443 = vsel %vm410, %v439, 0.0
      %v444 = vsel %vm415, %v440, 0.0
      %445 = vadd.xlane.f32.xlu0 %v444
      %v446 = vpop.xlane.xlu0 %445
      %v447 = vsel %vm415, %v441, 0.0
      %448 = vadd.xlane.f32.xlu0 %v447
      %v449 = vpop.xlane.xlu0 %448
      %v450 = vsel %vm415, %v442, 0.0
      %451 = vadd.xlane.f32.xlu0 %v450
      %v452 = vpop.xlane.xlu0 %451
      %v453 = vsel %vm415, %v443, 0.0
      %454 = vadd.xlane.f32.xlu0 %v453
      %v455 = vpop.xlane.xlu0 %454
      %v456 = vrcp.pop %v446
      %v457 = vmul.f32 %v440, %v456
      %v458 = vrcp.pop %v449
      %v459 = vmul.f32 %v441, %v458
      %v460 = vrcp.pop %v452
      %v461 = vmul.f32 %v442, %v460
      %v462 = vrcp.pop %v455
      %v463 = vmul.f32 %v443, %v462
      %v464 = vld [vmem:[%s5] sm:$0x1]
      %v466 = vlaneseq
      %v467 = vshrl.u32 %v466, 7
      %v468 = vsub.s32 0, %v467
      %v469 = vrot.slane %v464, %v468
      %v472 = vsel %vm415, %v457, 0
      %v475 = vsel %vm415, %v459, 0
      %v478 = vsel %vm415, %v461, 0
      %v481 = vsel %vm415, %v463, 0
      %483 = vmatprep.subr.mxu0 0.0
      %484 = vmatpush1.msra.mxu0 0.0
      %485 = vmatprep.subr.mxu0 0.0
      %486 = vmatpush1.msra.mxu0 0.0
      %487 = vmatprep.subr.mxu0 0.0
      %488 = vmatpush1.msra.mxu0 0.0
      %489 = vmatprep.subr.mxu0 0.0
      %490 = vmatpush1.msra.mxu0 0.0
      %491 = vmatprep.subr.mxu0 0.0
      %492 = vmatpush1.msra.mxu0 %v292
      %493 = vmatprep.subr.mxu0 0.0
      %494 = vmatpush1.msra.mxu0 %v291
      %495 = vmatprep.subr.mxu0 0.0
      %496 = vmatpush1.msra.mxu0 %v290
      %497 = vmatprep.subr.mxu0 0.0
      %498 = vmatpush1.msra.mxu0 %v289
      %499 = vmatprep.subr.mxu0 0.0
      %500 = vmatpush1.msra.mxu0 %v288
      %501 = vmatprep.subr.mxu0 0.0
      %502 = vmatpush1.msra.mxu0 %v287
      %503 = vmatprep.subr.mxu0 0.0
      %504 = vmatpush1.msra.mxu0 %v286
      %505 = vmatprep.subr.mxu0 0.0
      %506 = vmatpush1.msra.mxu0 %v285
      %507 = vmatprep.subr.mxu0 0.0
      %508 = vmatpush1.msra.mxu0 %v284
      %509 = vmatprep.subr.mxu0 0.0
      %510 = vmatpush1.msra.mxu0 %v283
      %511 = vmatprep.subr.mxu0 0.0
      %512 = vmatpush1.msra.mxu0 %v282
      %513 = vmatprep.subr.mxu0 0.0
      %514 = vmatpush1.msra.mxu0 %v281
      %515 = vmatprep.subr.mxu0 0.0
      %516 = vmatpush2.msra.mxu0 0.0
      %517 = vmatprep.subr.mxu0 0.0
      %518 = vmatpush2.msra.mxu0 0.0
      %519 = vmatprep.subr.mxu0 0.0
      %520 = vmatpush2.msra.mxu0 0.0
      %521 = vmatprep.subr.mxu0 0.0
      %522 = vmatpush2.msra.mxu0 0.0
      %523 = vmatprep.subr.mxu0 0.0
      %524 = vmatpush2.msra.mxu0 0.0
      %525 = vmatprep.subr.mxu0 0.0
      %526 = vmatpush2.msra.mxu0 0.0
      %527 = vmatprep.subr.mxu0 0.0
      %528 = vmatpush2.msra.mxu0 0.0
      %529 = vmatprep.subr.mxu0 0.0
      %530 = vmatpush2.msra.mxu0 0.0
      %531 = vmatprep.subr.mxu0 0.0
      %532 = vmatpush2.msra.mxu0 0.0
      %533 = vmatprep.subr.mxu0 0.0
      %534 = vmatpush2.msra.mxu0 0.0
      %535 = vmatprep.subr.mxu0 0.0
      %536 = vmatpush2.msra.mxu0 0.0
      %537 = vmatprep.subr.mxu0 0.0
      %538 = vmatpush2.msra.mxu0 0.0
      %539 = vmatprep.subr.mxu0 0.0
      %540 = vmatpush2.msra.mxu0 0.0
      %541 = vmatprep.subr.mxu0 0.0
      %542 = vmatpush2.msra.mxu0 0.0
      %543 = vmatprep.subr.mxu0 0.0
      %544 = vmatpush2.msra.mxu0 0.0
      %545 = vmatprep.subr.mxu0 0.0
      %546 = vmatpush2.msra.mxu0 0.0
      %547 = vmatprep.mubr.f32.mxu0 0.0
      %548 = vmatmul.mubr.f32.gmra.mxu0 %v472
      %v549 = vpop.f32.mrf.mxu0
      %v550 = vadd.f32 %v469, %v549
      %v551 = vpop.f32.mrf.mxu0
      %552 = vmatprep.mubr.f32.mxu0 0.0
      %553 = vmatmul.mubr.f32.gmra.mxu0 %v475
      %v554 = vpop.f32.mrf.mxu0
      %v555 = vadd.f32 %v469, %v554
      %v556 = vpop.f32.mrf.mxu0
      %557 = vmatprep.mubr.f32.mxu0 0.0
      %558 = vmatmul.mubr.f32.gmra.mxu0 %v478
      %v559 = vpop.f32.mrf.mxu0
      %v560 = vadd.f32 %v469, %v559
      %v561 = vpop.f32.mrf.mxu0
      %562 = vmatprep.mubr.f32.mxu0 0.0
      %563 = vmatmul.mubr.f32.gmra.mxu0 %v481
      %v564 = vpop.f32.mrf.mxu0
      %v565 = vadd.f32 %v469, %v564
      %v566 = vpop.f32.mrf.mxu0
      %567 = vdwg.mxu0
      %568 = vst [vmem:[%s275] sm:$0xff] %v550
      %569 = vst [vmem:[%s275 + $0x8] sm:$0xff] %v555
      %570 = vst [vmem:[%s275 + $0x10] sm:$0xff] %v560
      %571 = vst [vmem:[%s275 + $0x18] sm:$0xff] %v565
      %s572 = smul.u32 4, %s17
      %p573 = scmp.lt.s32.totalorder %s572, 11
      %s574 = scalar_select %p573, %s572, 11
      %s575 = smul.addr %s574, 8
      %s576 = scalar_lea.vmem %s6, %s575
      // Predicated region
      $region45: #{gat_forward.11} parent=43 // pred_check
        %p577 = pneg %p171
      $region46: #{gat_forward.11} parent=43 // pred_check_branch
        %579 = sbr.rel (%p577) target = $region48
      $region47: #{gat_forward.11} parent=43 // pred_region
        %s580 = smul.u32 4, %s17
      $region48: #{gat_forward.11} parent=43 // pred_fallthru
        _
    $region44: #{gat_forward.11} parent=5 // pred_fallthru
      _
    %p581 = scmp.le.s32.totalorder 2, %s12
    // Predicated region
    $region49: #{gat_forward.11} parent=5 // pred_check
      %p582 = pneg %p581
    $region50: #{gat_forward.11} parent=5 // pred_check_branch
      %584 = sbr.rel (%p582) target = $region52
    $region51: #{gat_forward.11} parent=5 // pred_region
      %s585 = ssub.s32 %s12, 2
      // Predicated region
      $region53: #{gat_forward.11} parent=51 // pred_check
        %p586 = pneg %p177
      $region54: #{gat_forward.11} parent=51 // pred_check_branch
        %588 = sbr.rel (%p586) target = $region56
      $region55: #{gat_forward.11} parent=51 // pred_region
        %s589 = smul.u32 4, %s18
        %p590 = scmp.lt.s32.totalorder %s589, 11
        %s591 = scalar_select %p590, %s589, 11
        %s592 = smul.addr %s591, 8
        %s593 = scalar_lea.vmem %s6, %s592
      $region56: #{gat_forward.11} parent=51 // pred_fallthru
        _
    $region52: #{gat_forward.11} parent=5 // pred_fallthru
      _
  $region6: #{gat_forward.11} parent=0 // loop_footer
    %s16 = sadd.s32 1, %s12
  $region7: #{gat_forward.11} parent=0 // loop_footer_branch
    %11 = sbr.rel target = $region3
  $region8: #{gat_forward.11} parent=0 // loop_exit
    _

</llo_original>
